<compile_context>
chip_gen: v7x
topology: tpu7x:2x2x1
jax: 0.10.0
libtpu: 0.0.40
codegen_flags: <defaults>
</compile_context>

<pallas_src>
import functools

import jax
import jax.numpy as jnp
from jax import lax
from jax.experimental import pallas as pl
from jax.experimental.pallas import tpu as pltpu

NEG_SLOPE = 0.1
BN_EPS = 1e-5


def _leaky_relu(x):
    # max(x, 0.1*x): mul+max (2 VPU ops) instead of cmp+mul+select.
    return jnp.maximum(x, NEG_SLOPE * x)


def resblock_kernel(x_ref, xt_ref, xb_ref, w1_ref, b1_ref, w2_ref, b2_ref,
                    o_ref, hp_ref):
    # x_ref : (1, TH, W, C)  f32  main row tile
    # xt_ref: (1, 1, W, C)   f32  row above the tile (clamped at image top)
    # xb_ref: (1, 1, W, C)   f32  row below the tile (clamped at image bottom)
    # w1_ref: (C, Cm)        bf16 1x1 conv weight, BN1 scale folded in
    # b1_ref: (1, Cm)        f32  folded BN1 bias
    # w2_ref: (3, 3*Cm, C)   bf16 3x3 conv weight, (kx, cin) stacked, BN2 scale folded
    # b2_ref: (1, C)         f32  folded BN2 bias
    # o_ref : (1, TH, W, C)  f32
    # hp_ref: (TH+2, W+2, 3*Cm) f32 scratch: 3 horizontally shifted copies of
    #         the conv1 output, kx taps stacked along the lane (channel) axis.
    _, TH, W, C = x_ref.shape
    Cm = w1_ref.shape[1]

    i = pl.program_id(1)
    last = pl.num_programs(1) - 1

    x_main = x_ref[0].reshape(TH * W, C)                        # (TH*W, C) f32
    x_rows = jnp.concatenate(
        [xt_ref[0].reshape(W, C), x_main, xb_ref[0].reshape(W, C)], axis=0)

    # ---- conv1 (1x1) + folded-BN bias + LeakyReLU (bf16 MXU, f32 accum) ----
    h = jnp.dot(x_rows.astype(jnp.bfloat16), w1_ref[...],
                preferred_element_type=jnp.float32)             # ((TH+2)*W, Cm)
    h = _leaky_relu(h + b1_ref[...])

    # Halo rows outside the image must be zero (SAME zero-padding for conv2).
    r = lax.broadcasted_iota(jnp.int32, ((TH + 2) * W, Cm), 0)
    pad = ((i == 0) & (r < W)) | ((i == last) & (r >= (TH + 1) * W))
    h = jnp.where(pad, 0.0, h)
    h_ext = h.reshape(TH + 2, W, Cm)                            # (TH+2, W, Cm)

    # ---- stack the 3 horizontal (kx) taps along the lane axis of hp_ref ----
    # After these stores: hp_ref[j, c, kx*Cm:(kx+1)*Cm] == h_pad[j, c-1+kx-1]
    # for the read window c in [1, W].
    hp_ref[:, 2:W + 2, 0 * Cm:1 * Cm] = h_ext        # kx = 0 tap (h[c-1])
    hp_ref[:, 1:W + 1, 1 * Cm:2 * Cm] = h_ext        # kx = 1 tap (h[c  ])
    hp_ref[:, 0:W,     2 * Cm:3 * Cm] = h_ext        # kx = 2 tap (h[c+1])
    # Border cells inside the read window that no shifted store covers -> zero
    # (only two 1-column strips; no full-scratch zeroing).
    hp_ref[:, 1:2,     0 * Cm:1 * Cm] = jnp.zeros((TH + 2, 1, Cm), jnp.float32)
    hp_ref[:, W:W + 1, 2 * Cm:3 * Cm] = jnp.zeros((TH + 2, 1, Cm), jnp.float32)

    # ---- conv2 (3x3): 3 matmuls, each contracting over 3*Cm ----
    acc = jnp.zeros((TH * W, C), jnp.float32)
    for ky in range(3):
        patch = hp_ref[ky:ky + TH, 1:W + 1, :].reshape(TH * W, 3 * Cm)
        acc = acc + jnp.dot(patch.astype(jnp.bfloat16), w2_ref[ky],
                            preferred_element_type=jnp.float32)

    y = _leaky_relu(acc + b2_ref[...]) + x_main                 # residual (f32)
    o_ref[0] = y.reshape(TH, W, C)


def _pick_tile_h(H, max_rows=64):
    """Largest row tile that divides H, is a multiple of 8 and <= max_rows.

    max_rows bounds the per-step VMEM footprint (pick smaller for v5e/v7x)."""
    cands = [t for t in range(8, min(max_rows, H) + 1, 8) if H % t == 0]
    return max(cands) if cands else H


def _vmem_limit_bytes(TH, W, C, Cm):
    f32, bf16 = 4, 2
    blk_in = (TH + 2) * W * C * f32                 # main tile + 2 halo rows
    blk_out = TH * W * C * f32
    wts = C * Cm * bf16 + Cm * f32 + 9 * Cm * C * bf16 + C * f32
    scratch = (TH + 2) * (W + 2) * 3 * Cm * f32
    temps = ((TH + 2) * W * (C + Cm) * f32          # gathered rows + conv1 out
             + TH * W * 3 * Cm * (f32 + bf16)       # patch slice + bf16 cast
             + 2 * TH * W * C * f32)                # accumulator + residual
    est = 2 * (blk_in + wts + blk_out) + scratch + temps   # double-buffered blocks
    return int(min(100 * 2 ** 20, max(32 * 2 ** 20, 2 * est)))


@functools.partial(jax.jit, static_argnames=("tile_h",))
def resblock_pallas(x_nhwc, w1_mat, b1, w2_mat, b2, *, tile_h=None):
    """x_nhwc: (N,H,W,C) f32.
    w1_mat: (C, Cm) 1x1 weight with BN1 scale folded in.
    w2_mat: (3, 3, Cm, C) (ky, kx, cin, cout) 3x3 weight with BN2 scale folded.
    b1/b2: folded BN biases (Cm,) / (C,)."""
    N, H, W, C = x_nhwc.shape
    Cm = w1_mat.shape[1]
    if tile_h is None:
        tile_h = _pick_tile_h(H)
    assert H % tile_h == 0, (H, tile_h)
    TH = tile_h
    n_tiles = H // TH

    w1_mat = w1_mat.astype(jnp.bfloat16)
    w2_mat = w2_mat.reshape(3, 3 * Cm, C).astype(jnp.bfloat16)
    b1 = b1.reshape(1, Cm).astype(jnp.float32)
    b2 = b2.reshape(1, C).astype(jnp.float32)

    return pl.pallas_call(
        resblock_kernel,
        out_shape=jax.ShapeDtypeStruct((N, H, W, C), jnp.float32),
        grid=(N, n_tiles),
        in_specs=[
            pl.BlockSpec((1, TH, W, C), lambda n, i: (n, i, 0, 0)),
            pl.BlockSpec((1, 1, W, C),
                         lambda n, i: (n, jnp.maximum(i * TH - 1, 0), 0, 0)),
            pl.BlockSpec((1, 1, W, C),
                         lambda n, i: (n, jnp.minimum(i * TH + TH, H - 1), 0, 0)),
            pl.BlockSpec((C, Cm), lambda n, i: (0, 0)),
            pl.BlockSpec((1, Cm), lambda n, i: (0, 0)),
            pl.BlockSpec((3, 3 * Cm, C), lambda n, i: (0, 0, 0)),
            pl.BlockSpec((1, C), lambda n, i: (0, 0)),
        ],
        out_specs=pl.BlockSpec((1, TH, W, C), lambda n, i: (n, i, 0, 0)),
        scratch_shapes=[pltpu.VMEM((TH + 2, W + 2, 3 * Cm), jnp.float32)],
        compiler_params=pltpu.CompilerParams(
            dimension_semantics=("parallel", "parallel"),
            vmem_limit_bytes=_vmem_limit_bytes(TH, W, C, Cm)),
    )(x_nhwc, x_nhwc, x_nhwc, w1_mat, b1, w2_mat, b2)


def fold_bn(gamma, beta, mean, var):
    scale = gamma / jnp.sqrt(var + BN_EPS)
    bias = beta - mean * scale
    return scale, bias


def resblock_reference(x_nhwc, w1_hwio, s1, b1, w2_hwio, s2, b2):
    """Pure-JAX f32 reference (NHWC convs) for the correctness check."""
    def conv_bn_act(x, w, scale, bias, pad):
        y = lax.conv_general_dilated(
            x, w, window_strides=(1, 1), padding=[(pad, pad), (pad, pad)],
            dimension_numbers=("NHWC", "HWIO", "NHWC"))
        return _leaky_relu(y * scale + bias)

    h = conv_bn_act(x_nhwc, w1_hwio, s1, b1, 0)
    h = conv_bn_act(h, w2_hwio, s2, b2, 1)
    return h + x_nhwc


if __name__ == "__main__":
    N, C, H, W = 2, 4, 16, 16
    Cm = C // 2

    key = jax.random.PRNGKey(0)
    (kx, k1, k2, kg1, kb1, km1, kv1,
     kg2, kb2, km2, kv2) = jax.random.split(key, 11)

    # Input (PyTorch-style NCHW), transposed to NHWC for the kernel.
    x_nchw = jax.random.normal(kx, (N, C, H, W), jnp.float32)
    x_nhwc = jnp.transpose(x_nchw, (0, 2, 3, 1))

    # Conv weights (PyTorch OIHW) -> HWIO for the reference / kernel layouts.
    w1_oihw = jax.random.normal(k1, (Cm, C, 1, 1), jnp.float32) * 0.1
    w2_oihw = jax.random.normal(k2, (C, Cm, 3, 3), jnp.float32) * 0.1
    w1_hwio = jnp.transpose(w1_oihw, (2, 3, 1, 0))   # (1,1,C,Cm)
    w2_hwio = jnp.transpose(w2_oihw, (2, 3, 1, 0))   # (3,3,Cm,C) = (ky,kx,ci,co)

    # BatchNorm params (eval mode), folded into per-channel scale/bias.
    g1 = 1.0 + 0.1 * jax.random.normal(kg1, (Cm,), jnp.float32)
    be1 = 0.1 * jax.random.normal(kb1, (Cm,), jnp.float32)
    m1 = 0.1 * jax.random.normal(km1, (Cm,), jnp.float32)
    v1 = jnp.abs(jax.random.normal(kv1, (Cm,), jnp.float32)) + 0.5
    g2 = 1.0 + 0.1 * jax.random.normal(kg2, (C,), jnp.float32)
    be2 = 0.1 * jax.random.normal(kb2, (C,), jnp.float32)
    m2 = 0.1 * jax.random.normal(km2, (C,), jnp.float32)
    v2 = jnp.abs(jax.random.normal(kv2, (C,), jnp.float32)) + 0.5

    s1, b1 = fold_bn(g1, be1, m1, v1)
    s2, b2 = fold_bn(g2, be2, m2, v2)

    # Fold the BN scales into the conv weights (kernel only adds the bias).
    w1_mat = w1_hwio.reshape(C, Cm) * s1[None, :]            # (C, Cm)
    w2_mat = w2_hwio * s2[None, None, None, :]               # (3,3,Cm,C)

    out = resblock_pallas(x_nhwc, w1_mat, b1, w2_mat, b2, tile_h=8)
    out = jax.block_until_ready(out)

    ref = resblock_reference(x_nhwc, w1_hwio, s1, b1, w2_hwio, s2, b2)
    assert out.shape == (N, H, W, C)
    # bf16 MXU operands (f32 accumulation) -> relaxed tolerance vs f32 ref.
    assert jnp.allclose(out, ref, rtol=3e-2, atol=3e-2), (
        float(jnp.max(jnp.abs(out - ref))))

    print("KERNEL_OK")
</pallas_src>

<mosaic_0001>
module attributes {stable_mosaic.version = 11 : i64} {
  func.func @resblock_kernel(%arg0: i32, %arg1: i32, %arg2: memref<1x8x16x4xf32, #tpu.memory_space<vmem>>, %arg3: memref<1x1x16x4xf32, #tpu.memory_space<vmem>>, %arg4: memref<1x1x16x4xf32, #tpu.memory_space<vmem>>, %arg5: memref<4x2xbf16, #tpu.memory_space<vmem>>, %arg6: memref<1x2xf32, #tpu.memory_space<vmem>>, %arg7: memref<3x6x4xbf16, #tpu.memory_space<vmem>>, %arg8: memref<1x4xf32, #tpu.memory_space<vmem>>, %arg9: memref<1x8x16x4xf32, #tpu.memory_space<vmem>>, %arg10: memref<10x18x6xf32, #tpu.memory_space<vmem>>) attributes {dimension_semantics = [#tpu.dimension_semantics<parallel>, #tpu.dimension_semantics<parallel>], iteration_bounds = array<i64: 2, 2>, scalar_prefetch = 0 : i64, scratch_operands = 1 : i64, tpu.core_type = #tpu.core_type<tc>, window_params = [{transform_indices = @transform_0, window_bounds = array<i64: 1, 8, 16, 4>}, {transform_indices = @transform_1, window_bounds = array<i64: 1, 1, 16, 4>}, {transform_indices = @transform_2, window_bounds = array<i64: 1, 1, 16, 4>}, {pipeline_mode = #tpu.pipeline_mode<synchronous>, transform_indices = @transform_3, window_bounds = array<i64: 4, 2>}, {pipeline_mode = #tpu.pipeline_mode<synchronous>, transform_indices = @transform_4, window_bounds = array<i64: 1, 2>}, {pipeline_mode = #tpu.pipeline_mode<synchronous>, transform_indices = @transform_5, window_bounds = array<i64: 3, 6, 4>}, {pipeline_mode = #tpu.pipeline_mode<synchronous>, transform_indices = @transform_6, window_bounds = array<i64: 1, 4>}, {transform_indices = @transform_7, window_bounds = array<i64: 1, 8, 16, 4>}]} {
    %c0 = arith.constant 0 : index
    %c0_0 = arith.constant 0 : index
    %c0_1 = arith.constant 0 : index
    %c0_2 = arith.constant 0 : index
    %0 = vector.load %arg2[%c0, %c0_0, %c0_1, %c0_2] : memref<1x8x16x4xf32, #tpu.memory_space<vmem>>, vector<1x8x16x4xf32>
    %1 = vector.shape_cast %0 : vector<1x8x16x4xf32> to vector<8x16x4xf32>
    %2 = vector.shape_cast %1 : vector<8x16x4xf32> to vector<128x4xf32>
    %c0_3 = arith.constant 0 : index
    %c0_4 = arith.constant 0 : index
    %c0_5 = arith.constant 0 : index
    %c0_6 = arith.constant 0 : index
    %3 = vector.load %arg3[%c0_3, %c0_4, %c0_5, %c0_6] : memref<1x1x16x4xf32, #tpu.memory_space<vmem>>, vector<1x1x16x4xf32>
    %4 = vector.shape_cast %3 : vector<1x1x16x4xf32> to vector<1x16x4xf32>
    %5 = vector.shape_cast %4 : vector<1x16x4xf32> to vector<16x4xf32>
    %c0_7 = arith.constant 0 : index
    %c0_8 = arith.constant 0 : index
    %c0_9 = arith.constant 0 : index
    %c0_10 = arith.constant 0 : index
    %6 = vector.load %arg4[%c0_7, %c0_8, %c0_9, %c0_10] : memref<1x1x16x4xf32, #tpu.memory_space<vmem>>, vector<1x1x16x4xf32>
    %7 = vector.shape_cast %6 : vector<1x1x16x4xf32> to vector<1x16x4xf32>
    %8 = vector.shape_cast %7 : vector<1x16x4xf32> to vector<16x4xf32>
    %9 = tpu.concatenate %5, %2, %8 in 0 : vector<16x4xf32>, vector<128x4xf32>, vector<16x4xf32> -> vector<160x4xf32>
    %10 = arith.truncf %9 : vector<160x4xf32> to vector<160x4xbf16>
    %c0_11 = arith.constant 0 : index
    %c0_12 = arith.constant 0 : index
    %11 = vector.load %arg5[%c0_11, %c0_12] : memref<4x2xbf16, #tpu.memory_space<vmem>>, vector<4x2xbf16>
    %cst = arith.constant dense<0.000000e+00> : vector<160x2xf32>
    %12 = tpu.matmul %10, %11, %cst {dimension_numbers = #tpu.dot_dimension_numbers<[1], [0], [0], [1], [0, 0, 1, 1], [], []>} : vector<160x4xbf16>, vector<4x2xbf16>, vector<160x2xf32> -> vector<160x2xf32>
    %c0_13 = arith.constant 0 : index
    %c0_14 = arith.constant 0 : index
    %13 = vector.load %arg6[%c0_13, %c0_14] : memref<1x2xf32, #tpu.memory_space<vmem>>, vector<1x2xf32>
    %14 = vector.broadcast %13 : vector<1x2xf32> to vector<160x2xf32>
    %15 = arith.addf %12, %14 : vector<160x2xf32>
    %cst_15 = arith.constant 1.000000e-01 : f32
    %16 = vector.broadcast %cst_15 : f32 to vector<160x2xf32>
    %17 = arith.mulf %16, %15 : vector<160x2xf32>
    %18 = arith.maximumf %15, %17 : vector<160x2xf32>
    %19 = tpu.iota {dimensions = array<i32: 0>} : vector<160x2xi32>
    %c0_i32 = arith.constant 0 : i32
    %20 = arith.cmpi eq, %arg1, %c0_i32 : i32
    %c16_i32 = arith.constant 16 : i32
    %21 = vector.broadcast %c16_i32 : i32 to vector<160x2xi32>
    %22 = arith.cmpi slt, %19, %21 : vector<160x2xi32>
    %23 = vector.broadcast %20 : i1 to vector<160x2xi1>
    %24 = arith.andi %23, %22 : vector<160x2xi1>
    %c1_i32 = arith.constant 1 : i32
    %25 = arith.cmpi eq, %arg1, %c1_i32 : i32
    %c144_i32 = arith.constant 144 : i32
    %26 = vector.broadcast %c144_i32 : i32 to vector<160x2xi32>
    %27 = arith.cmpi sge, %19, %26 : vector<160x2xi32>
    %28 = vector.broadcast %25 : i1 to vector<160x2xi1>
    %29 = arith.andi %28, %27 : vector<160x2xi1>
    %30 = arith.ori %24, %29 : vector<160x2xi1>
    %cst_16 = arith.constant 0.000000e+00 : f32
    %31 = vector.broadcast %cst_16 : f32 to vector<160x2xf32>
    %32 = arith.select %30, %31, %18 : vector<160x2xi1>, vector<160x2xf32>
    %33 = vector.shape_cast %32 : vector<160x2xf32> to vector<10x16x2xf32>
    %c0_17 = arith.constant 0 : index
    %c2 = arith.constant 2 : index
    %c0_18 = arith.constant 0 : index
    %34 = vector.load %arg10[%c0_17, %c2, %c0_18] : memref<10x18x6xf32, #tpu.memory_space<vmem>>, vector<10x16x2xf32>
    tpu.vector_store %arg10[%c0_17, %c2, %c0_18], %33 {strides = array<i32>} : memref<10x18x6xf32, #tpu.memory_space<vmem>>, vector<10x16x2xf32>,
    %c0_19 = arith.constant 0 : index
    %c1 = arith.constant 1 : index
    %c2_20 = arith.constant 2 : index
    %35 = vector.load %arg10[%c0_19, %c1, %c2_20] : memref<10x18x6xf32, #tpu.memory_space<vmem>>, vector<10x16x2xf32>
    tpu.vector_store %arg10[%c0_19, %c1, %c2_20], %33 {strides = array<i32>} : memref<10x18x6xf32, #tpu.memory_space<vmem>>, vector<10x16x2xf32>,
    %c0_21 = arith.constant 0 : index
    %c0_22 = arith.constant 0 : index
    %c4 = arith.constant 4 : index
    %36 = vector.load %arg10[%c0_21, %c0_22, %c4] : memref<10x18x6xf32, #tpu.memory_space<vmem>>, vector<10x16x2xf32>
    tpu.vector_store %arg10[%c0_21, %c0_22, %c4], %33 {strides = array<i32>} : memref<10x18x6xf32, #tpu.memory_space<vmem>>, vector<10x16x2xf32>,
    %cst_23 = arith.constant 0.000000e+00 : f32
    %37 = vector.broadcast %cst_23 : f32 to vector<10x1x2xf32>
    %c0_24 = arith.constant 0 : index
    %c1_25 = arith.constant 1 : index
    %c0_26 = arith.constant 0 : index
    %38 = vector.load %arg10[%c0_24, %c1_25, %c0_26] : memref<10x18x6xf32, #tpu.memory_space<vmem>>, vector<10x1x2xf32>
    tpu.vector_store %arg10[%c0_24, %c1_25, %c0_26], %37 {strides = array<i32>} : memref<10x18x6xf32, #tpu.memory_space<vmem>>, vector<10x1x2xf32>,
    %cst_27 = arith.constant 0.000000e+00 : f32
    %39 = vector.broadcast %cst_27 : f32 to vector<10x1x2xf32>
    %c0_28 = arith.constant 0 : index
    %c16 = arith.constant 16 : index
    %c4_29 = arith.constant 4 : index
    %40 = vector.load %arg10[%c0_28, %c16, %c4_29] : memref<10x18x6xf32, #tpu.memory_space<vmem>>, vector<10x1x2xf32>
    tpu.vector_store %arg10[%c0_28, %c16, %c4_29], %39 {strides = array<i32>} : memref<10x18x6xf32, #tpu.memory_space<vmem>>, vector<10x1x2xf32>,
    %cst_30 = arith.constant 0.000000e+00 : f32
    %41 = vector.broadcast %cst_30 : f32 to vector<128x4xf32>
    %c0_31 = arith.constant 0 : index
    %c1_32 = arith.constant 1 : index
    %c0_33 = arith.constant 0 : index
    %42 = vector.load %arg10[%c0_31, %c1_32, %c0_33] : memref<10x18x6xf32, #tpu.memory_space<vmem>>, vector<8x16x6xf32>
    %43 = vector.shape_cast %42 : vector<8x16x6xf32> to vector<128x6xf32>
    %44 = arith.truncf %43 : vector<128x6xf32> to vector<128x6xbf16>
    %c0_34 = arith.constant 0 : index
    %c0_35 = arith.constant 0 : index
    %c0_36 = arith.constant 0 : index
    %45 = vector.load %arg7[%c0_34, %c0_35, %c0_36] : memref<3x6x4xbf16, #tpu.memory_space<vmem>>, vector<1x6x4xbf16>
    %46 = vector.shape_cast %45 : vector<1x6x4xbf16> to vector<6x4xbf16>
    %cst_37 = arith.constant dense<0.000000e+00> : vector<128x4xf32>
    %47 = tpu.matmul %44, %46, %cst_37 {dimension_numbers = #tpu.dot_dimension_numbers<[1], [0], [0], [1], [0, 0, 1, 1], [], []>} : vector<128x6xbf16>, vector<6x4xbf16>, vector<128x4xf32> -> vector<128x4xf32>
    %48 = arith.addf %41, %47 : vector<128x4xf32>
    %c1_38 = arith.constant 1 : index
    %c1_39 = arith.constant 1 : index
    %c0_40 = arith.constant 0 : index
    %49 = vector.load %arg10[%c1_38, %c1_39, %c0_40] : memref<10x18x6xf32, #tpu.memory_space<vmem>>, vector<8x16x6xf32>
    %50 = vector.shape_cast %49 : vector<8x16x6xf32> to vector<128x6xf32>
    %51 = arith.truncf %50 : vector<128x6xf32> to vector<128x6xbf16>
    %c1_41 = arith.constant 1 : index
    %c0_42 = arith.constant 0 : index
    %c0_43 = arith.constant 0 : index
    %52 = vector.load %arg7[%c1_41, %c0_42, %c0_43] : memref<3x6x4xbf16, #tpu.memory_space<vmem>>, vector<1x6x4xbf16>
    %53 = vector.shape_cast %52 : vector<1x6x4xbf16> to vector<6x4xbf16>
    %cst_44 = arith.constant dense<0.000000e+00> : vector<128x4xf32>
    %54 = tpu.matmul %51, %53, %cst_44 {dimension_numbers = #tpu.dot_dimension_numbers<[1], [0], [0], [1], [0, 0, 1, 1], [], []>} : vector<128x6xbf16>, vector<6x4xbf16>, vector<128x4xf32> -> vector<128x4xf32>
    %55 = arith.addf %48, %54 : vector<128x4xf32>
    %c2_45 = arith.constant 2 : index
    %c1_46 = arith.constant 1 : index
    %c0_47 = arith.constant 0 : index
    %56 = vector.load %arg10[%c2_45, %c1_46, %c0_47] : memref<10x18x6xf32, #tpu.memory_space<vmem>>, vector<8x16x6xf32>
    %57 = vector.shape_cast %56 : vector<8x16x6xf32> to vector<128x6xf32>
    %58 = arith.truncf %57 : vector<128x6xf32> to vector<128x6xbf16>
    %c2_48 = arith.constant 2 : index
    %c0_49 = arith.constant 0 : index
    %c0_50 = arith.constant 0 : index
    %59 = vector.load %arg7[%c2_48, %c0_49, %c0_50] : memref<3x6x4xbf16, #tpu.memory_space<vmem>>, vector<1x6x4xbf16>
    %60 = vector.shape_cast %59 : vector<1x6x4xbf16> to vector<6x4xbf16>
    %cst_51 = arith.constant dense<0.000000e+00> : vector<128x4xf32>
    %61 = tpu.matmul %58, %60, %cst_51 {dimension_numbers = #tpu.dot_dimension_numbers<[1], [0], [0], [1], [0, 0, 1, 1], [], []>} : vector<128x6xbf16>, vector<6x4xbf16>, vector<128x4xf32> -> vector<128x4xf32>
    %62 = arith.addf %55, %61 : vector<128x4xf32>
    %c0_52 = arith.constant 0 : index
    %c0_53 = arith.constant 0 : index
    %63 = vector.load %arg8[%c0_52, %c0_53] : memref<1x4xf32, #tpu.memory_space<vmem>>, vector<1x4xf32>
    %64 = vector.broadcast %63 : vector<1x4xf32> to vector<128x4xf32>
    %65 = arith.addf %62, %64 : vector<128x4xf32>
    %cst_54 = arith.constant 1.000000e-01 : f32
    %66 = vector.broadcast %cst_54 : f32 to vector<128x4xf32>
    %67 = arith.mulf %66, %65 : vector<128x4xf32>
    %68 = arith.maximumf %65, %67 : vector<128x4xf32>
    %69 = arith.addf %68, %2 : vector<128x4xf32>
    %70 = vector.shape_cast %69 : vector<128x4xf32> to vector<8x16x4xf32>
    %c0_55 = arith.constant 0 : index
    %c0_56 = arith.constant 0 : index
    %c0_57 = arith.constant 0 : index
    %c0_58 = arith.constant 0 : index
    %71 = vector.load %arg9[%c0_55, %c0_56, %c0_57, %c0_58] : memref<1x8x16x4xf32, #tpu.memory_space<vmem>>, vector<1x8x16x4xf32>
    %72 = vector.shape_cast %71 : vector<1x8x16x4xf32> to vector<8x16x4xf32>
    %73 = vector.shape_cast %70 : vector<8x16x4xf32> to vector<1x8x16x4xf32>
    tpu.vector_store %arg9[%c0_55, %c0_56, %c0_57, %c0_58], %73 {strides = array<i32>} : memref<1x8x16x4xf32, #tpu.memory_space<vmem>>, vector<1x8x16x4xf32>,
    return
  }
  func.func @transform_0(%arg0: i32, %arg1: i32) -> (i32, i32, i32, i32) {
    %c0_i32 = arith.constant 0 : i32
    %c0_i32_0 = arith.constant 0 : i32
    %c0_i32_1 = arith.constant 0 : i32
    return %arg0, %arg1, %c0_i32, %c0_i32_0 : i32, i32, i32, i32
  }
  func.func @transform_1(%arg0: i32, %arg1: i32) -> (i32, i32, i32, i32) {
    %c8_i32 = arith.constant 8 : i32
    %0 = arith.muli %arg1, %c8_i32 : i32
    %c1_i32 = arith.constant 1 : i32
    %1 = arith.subi %0, %c1_i32 : i32
    %c0_i32 = arith.constant 0 : i32
    %2 = arith.maxsi %1, %c0_i32 : i32
    %c0_i32_0 = arith.constant 0 : i32
    %c0_i32_1 = arith.constant 0 : i32
    %c0_i32_2 = arith.constant 0 : i32
    return %arg0, %2, %c0_i32_0, %c0_i32_1 : i32, i32, i32, i32
  }
  func.func @transform_2(%arg0: i32, %arg1: i32) -> (i32, i32, i32, i32) {
    %c8_i32 = arith.constant 8 : i32
    %0 = arith.muli %arg1, %c8_i32 : i32
    %c8_i32_0 = arith.constant 8 : i32
    %1 = arith.addi %0, %c8_i32_0 : i32
    %c15_i32 = arith.constant 15 : i32
    %2 = arith.minsi %1, %c15_i32 : i32
    %c0_i32 = arith.constant 0 : i32
    %c0_i32_1 = arith.constant 0 : i32
    %c0_i32_2 = arith.constant 0 : i32
    return %arg0, %2, %c0_i32, %c0_i32_1 : i32, i32, i32, i32
  }
  func.func @transform_3(%arg0: i32, %arg1: i32) -> (i32, i32) {
    %c0_i32 = arith.constant 0 : i32
    %c0_i32_0 = arith.constant 0 : i32
    %c0_i32_1 = arith.constant 0 : i32
    return %c0_i32, %c0_i32_0 : i32, i32
  }
  func.func @transform_4(%arg0: i32, %arg1: i32) -> (i32, i32) {
    %c0_i32 = arith.constant 0 : i32
    %c0_i32_0 = arith.constant 0 : i32
    %c0_i32_1 = arith.constant 0 : i32
    return %c0_i32, %c0_i32_0 : i32, i32
  }
  func.func @transform_5(%arg0: i32, %arg1: i32) -> (i32, i32, i32) {
    %c0_i32 = arith.constant 0 : i32
    %c0_i32_0 = arith.constant 0 : i32
    %c0_i32_1 = arith.constant 0 : i32
    %c0_i32_2 = arith.constant 0 : i32
    return %c0_i32, %c0_i32_0, %c0_i32_1 : i32, i32, i32
  }
  func.func @transform_6(%arg0: i32, %arg1: i32) -> (i32, i32) {
    %c0_i32 = arith.constant 0 : i32
    %c0_i32_0 = arith.constant 0 : i32
    %c0_i32_1 = arith.constant 0 : i32
    return %c0_i32, %c0_i32_0 : i32, i32
  }
  func.func @transform_7(%arg0: i32, %arg1: i32) -> (i32, i32, i32, i32) {
    %c0_i32 = arith.constant 0 : i32
    %c0_i32_0 = arith.constant 0 : i32
    %c0_i32_1 = arith.constant 0 : i32
    return %arg0, %arg1, %c0_i32, %c0_i32_0 : i32, i32, i32, i32
  }
}

</mosaic_0001>

<llo_original>
// kernel: resblock_pallas.1
$region0: #{resblock_pallas.1}
  #allocation0 [shape = 'u32[]', space=smem, size = 0x4, offset = 0x4, fixed_abs, tag = 'smem constant byte address 0x4 - core index']
  #allocation1 [shape = 'u32[144,128]{1,0:T(1,128)}', space=vmem, size = 0x12000, scoped, tag = 'internal scratch']
  #allocation2 [shape = 'f32[10,18,6]{2,1,0:T(8,128)}', space=vmem, size = 0x1e000, scoped, tag = 'scratch operand']
  %s0 = inlined_call_operand.vmem [shape: f32[2,16,16,4], index: 0, kind: input, shape index: {}, may-alias: {0,1,2}]
  %s1 = inlined_call_operand.vmem [shape: f32[2,16,16,4], index: 1, kind: input, shape index: {}, may-alias: {0,1,2}]
  %s2 = inlined_call_operand.vmem [shape: f32[2,16,16,4], index: 2, kind: input, shape index: {}, may-alias: {0,1,2}]
  %s3 = inlined_call_operand.vmem [shape: bf16[4,2], index: 3, kind: input, shape index: {}]
  %s4 = inlined_call_operand.vmem [shape: f32[1,2], index: 4, kind: input, shape index: {}]
  %s5 = inlined_call_operand.vmem [shape: bf16[3,6,4], index: 5, kind: input, shape index: {}]
  %s6 = inlined_call_operand.vmem [shape: f32[1,4], index: 6, kind: input, shape index: {}]
  %s7 = inlined_call_operand.vmem [shape: f32[2,16,16,4], index: 7, kind: output, shape index: {}]
  %s8 = sld [smem:[#allocation0]]
  $region61: #{resblock_pallas.1} parent=0
    _
  %s10 = ssub.s32 1, %s8
  %s11 = scalar_select 0, %s10, %s8
  loop: start=0, step=1, limit=6
  $region2: #{resblock_pallas.1} parent=0 // loop_pre_header
    _
  $region3: #{resblock_pallas.1} parent=0 // loop_header
    %s13 = sphi 0, %s17
    %p14 = scmp.ge.s32.totalorder %s13, 6
    %s20 = sphi 0, %s32
    %s21 = sphi 0, %s28
    %s22 = sphi 0, %s20
    %s23 = sphi 0, %s21
    %s24 = sphi 0, %s22
    %s25 = sphi 0, %s23
    %s37 = sphi 0, %s39
    %s40 = sphi 0, %s37
    %s41 = sphi 0, %s40
    %s57 = sphi 0, %s41
    %s73 = sphi 0, %s75
    %s76 = sphi 0, %s73
    %s77 = sphi 0, %s76
    %s93 = sphi 0, %s77
    %s109 = sphi 0, %s111
    %s112 = sphi 0, %s109
    %s113 = sphi 0, %s112
    %s129 = sphi 0, %s113
    %s133 = sphi 0, %s133
    %s135 = sphi 0, %s133
    %s136 = sphi 0, %s135
    %s150 = sphi 0, %s136
    %s154 = sphi 0, %s154
    %s156 = sphi 0, %s154
    %s157 = sphi 0, %s156
    %s171 = sphi 0, %s157
    %s175 = sphi 0, %s175
    %s177 = sphi 0, %s175
    %s178 = sphi 0, %s177
    %s192 = sphi 0, %s178
    %s196 = sphi 0, %s196
    %s198 = sphi 0, %s196
    %s199 = sphi 0, %s198
    %s213 = sphi 0, %s199
    %s221 = sphi 0, %s223
    %s224 = sphi 0, %s221
    %s225 = sphi 0, %s224
    %s241 = sphi 0, %s225
  $region4: #{resblock_pallas.1} parent=0 // loop_header_branch
    %16 = sbr.rel (%p14) target = $region8
  $region5: #{resblock_pallas.1} parent=0 // loop_body
    %s18 = ssub.s32 %s13, 1
    %s19 = ssub.s32 %s13, 2
    %s26 = sadd.s32 1, %s21
    %p27 = scmp.ge.s32.totalorder %s26, 2
    %s28 = scalar_select %p27, 0, %s26
    %s29 = sadd.s32 1, %s20
    %s30 = scalar_select %p27, %s29, %s20
    %p31 = scmp.ge.s32.totalorder %s30, 2
    %s32 = scalar_select %p31, 0, %s30
    %s33 = ssub.s32 %s20, %s32
    %s34 = ssub.s32 %s21, %s28
    %s35 = sor.u32 %s33, %s34
    %p36 = scmp.eq.s32.totalorder %s35, 0
    %s38 = sadd.s32 %s37, 1
    %s39 = scalar_select %p36, %s37, %s38
    %p42 = pneg %p36
    %p43 = scmp.eq.s32.totalorder %s13, 3
    %p44 = por %p42, %p43
    %p45 = scmp.ne.s32.totalorder %s37, %s40
    %p46 = scmp.eq.s32.totalorder %s13, 0
    %p47 = por %p45, %p46
    %p48 = scmp.ne.s32.totalorder %s37, %s40
    %p49 = scmp.eq.s32.totalorder %s18, 3
    %p50 = por %p48, %p49
    %p51 = scmp.ne.s32.totalorder %s40, %s41
    %p52 = scmp.eq.s32.totalorder %s18, 0
    %p53 = por %p51, %p52
    %p54 = scmp.ne.s32.totalorder %s40, %s41
    %p55 = scmp.eq.s32.totalorder %s19, 3
    %p56 = por %p54, %p55
    %p58 = scmp.ne.s32.totalorder %s41, %s57
    %p59 = scmp.eq.s32.totalorder %s19, 0
    %p60 = por %p58, %p59
    %s61 = smul.u32 %s21, 8
    %s62 = ssub.s32 %s61, 1
    %p63 = scmp.gt.s32.totalorder %s62, 0
    %s64 = scalar_select %p63, %s62, 0
    %s65 = smul.u32 %s28, 8
    %s66 = ssub.s32 %s65, 1
    %p67 = scmp.gt.s32.totalorder %s66, 0
    %s68 = scalar_select %p67, %s66, 0
    %s69 = ssub.s32 %s20, %s32
    %s70 = ssub.s32 %s64, %s68
    %s71 = sor.u32 %s69, %s70
    %p72 = scmp.eq.s32.totalorder %s71, 0
    %s74 = sadd.s32 %s73, 1
    %s75 = scalar_select %p72, %s73, %s74
    %p78 = pneg %p72
    %p79 = scmp.eq.s32.totalorder %s13, 3
    %p80 = por %p78, %p79
    %p81 = scmp.ne.s32.totalorder %s73, %s76
    %p82 = scmp.eq.s32.totalorder %s13, 0
    %p83 = por %p81, %p82
    %p84 = scmp.ne.s32.totalorder %s73, %s76
    %p85 = scmp.eq.s32.totalorder %s18, 3
    %p86 = por %p84, %p85
    %p87 = scmp.ne.s32.totalorder %s76, %s77
    %p88 = scmp.eq.s32.totalorder %s18, 0
    %p89 = por %p87, %p88
    %p90 = scmp.ne.s32.totalorder %s76, %s77
    %p91 = scmp.eq.s32.totalorder %s19, 3
    %p92 = por %p90, %p91
    %p94 = scmp.ne.s32.totalorder %s77, %s93
    %p95 = scmp.eq.s32.totalorder %s19, 0
    %p96 = por %p94, %p95
    %s97 = smul.u32 %s21, 8
    %s98 = sadd.s32 %s97, 8
    %p99 = scmp.lt.s32.totalorder %s98, 15
    %s100 = scalar_select %p99, %s98, 15
    %s101 = smul.u32 %s28, 8
    %s102 = sadd.s32 %s101, 8
    %p103 = scmp.lt.s32.totalorder %s102, 15
    %s104 = scalar_select %p103, %s102, 15
    %s105 = ssub.s32 %s20, %s32
    %s106 = ssub.s32 %s100, %s104
    %s107 = sor.u32 %s105, %s106
    %p108 = scmp.eq.s32.totalorder %s107, 0
    %s110 = sadd.s32 %s109, 1
    %s111 = scalar_select %p108, %s109, %s110
    %p114 = pneg %p108
    %p115 = scmp.eq.s32.totalorder %s13, 3
    %p116 = por %p114, %p115
    %p117 = scmp.ne.s32.totalorder %s109, %s112
    %p118 = scmp.eq.s32.totalorder %s13, 0
    %p119 = por %p117, %p118
    %p120 = scmp.ne.s32.totalorder %s109, %s112
    %p121 = scmp.eq.s32.totalorder %s18, 3
    %p122 = por %p120, %p121
    %p123 = scmp.ne.s32.totalorder %s112, %s113
    %p124 = scmp.eq.s32.totalorder %s18, 0
    %p125 = por %p123, %p124
    %p126 = scmp.ne.s32.totalorder %s112, %s113
    %p127 = scmp.eq.s32.totalorder %s19, 3
    %p128 = por %p126, %p127
    %p130 = scmp.ne.s32.totalorder %s113, %s129
    %p131 = scmp.eq.s32.totalorder %s19, 0
    %p132 = por %p130, %p131
    %s134 = sadd.s32 %s133, 1
    %p137 = scmp.eq.s32.totalorder %s13, 3
    %p138 = scmp.ne.s32.totalorder %s133, %s135
    %p139 = scmp.eq.s32.totalorder %s13, 0
    %p140 = por %p138, %p139
    %p141 = scmp.ne.s32.totalorder %s133, %s135
    %p142 = scmp.eq.s32.totalorder %s18, 3
    %p143 = por %p141, %p142
    %p144 = scmp.ne.s32.totalorder %s135, %s136
    %p145 = scmp.eq.s32.totalorder %s18, 0
    %p146 = por %p144, %p145
    %p147 = scmp.ne.s32.totalorder %s135, %s136
    %p148 = scmp.eq.s32.totalorder %s19, 3
    %p149 = por %p147, %p148
    %p151 = scmp.ne.s32.totalorder %s136, %s150
    %p152 = scmp.eq.s32.totalorder %s19, 0
    %p153 = por %p151, %p152
    %s155 = sadd.s32 %s154, 1
    %p158 = scmp.eq.s32.totalorder %s13, 3
    %p159 = scmp.ne.s32.totalorder %s154, %s156
    %p160 = scmp.eq.s32.totalorder %s13, 0
    %p161 = por %p159, %p160
    %p162 = scmp.ne.s32.totalorder %s154, %s156
    %p163 = scmp.eq.s32.totalorder %s18, 3
    %p164 = por %p162, %p163
    %p165 = scmp.ne.s32.totalorder %s156, %s157
    %p166 = scmp.eq.s32.totalorder %s18, 0
    %p167 = por %p165, %p166
    %p168 = scmp.ne.s32.totalorder %s156, %s157
    %p169 = scmp.eq.s32.totalorder %s19, 3
    %p170 = por %p168, %p169
    %p172 = scmp.ne.s32.totalorder %s157, %s171
    %p173 = scmp.eq.s32.totalorder %s19, 0
    %p174 = por %p172, %p173
    %s176 = sadd.s32 %s175, 1
    %p179 = scmp.eq.s32.totalorder %s13, 3
    %p180 = scmp.ne.s32.totalorder %s175, %s177
    %p181 = scmp.eq.s32.totalorder %s13, 0
    %p182 = por %p180, %p181
    %p183 = scmp.ne.s32.totalorder %s175, %s177
    %p184 = scmp.eq.s32.totalorder %s18, 3
    %p185 = por %p183, %p184
    %p186 = scmp.ne.s32.totalorder %s177, %s178
    %p187 = scmp.eq.s32.totalorder %s18, 0
    %p188 = por %p186, %p187
    %p189 = scmp.ne.s32.totalorder %s177, %s178
    %p190 = scmp.eq.s32.totalorder %s19, 3
    %p191 = por %p189, %p190
    %p193 = scmp.ne.s32.totalorder %s178, %s192
    %p194 = scmp.eq.s32.totalorder %s19, 0
    %p195 = por %p193, %p194
    %s197 = sadd.s32 %s196, 1
    %p200 = scmp.eq.s32.totalorder %s13, 3
    %p201 = scmp.ne.s32.totalorder %s196, %s198
    %p202 = scmp.eq.s32.totalorder %s13, 0
    %p203 = por %p201, %p202
    %p204 = scmp.ne.s32.totalorder %s196, %s198
    %p205 = scmp.eq.s32.totalorder %s18, 3
    %p206 = por %p204, %p205
    %p207 = scmp.ne.s32.totalorder %s198, %s199
    %p208 = scmp.eq.s32.totalorder %s18, 0
    %p209 = por %p207, %p208
    %p210 = scmp.ne.s32.totalorder %s198, %s199
    %p211 = scmp.eq.s32.totalorder %s19, 3
    %p212 = por %p210, %p211
    %p214 = scmp.ne.s32.totalorder %s199, %s213
    %p215 = scmp.eq.s32.totalorder %s19, 0
    %p216 = por %p214, %p215
    %s217 = ssub.s32 %s20, %s32
    %s218 = ssub.s32 %s21, %s28
    %s219 = sor.u32 %s217, %s218
    %p220 = scmp.eq.s32.totalorder %s219, 0
    %s222 = sadd.s32 %s221, 1
    %s223 = scalar_select %p220, %s221, %s222
    %p226 = pneg %p220
    %p227 = scmp.eq.s32.totalorder %s13, 3
    %p228 = por %p226, %p227
    %p229 = scmp.ne.s32.totalorder %s221, %s224
    %p230 = scmp.eq.s32.totalorder %s13, 0
    %p231 = por %p229, %p230
    %p232 = scmp.ne.s32.totalorder %s221, %s224
    %p233 = scmp.eq.s32.totalorder %s18, 3
    %p234 = por %p232, %p233
    %p235 = scmp.ne.s32.totalorder %s224, %s225
    %p236 = scmp.eq.s32.totalorder %s18, 0
    %p237 = por %p235, %p236
    %p238 = scmp.ne.s32.totalorder %s224, %s225
    %p239 = scmp.eq.s32.totalorder %s19, 3
    %p240 = por %p238, %p239
    %p242 = scmp.ne.s32.totalorder %s225, %s241
    %p243 = scmp.eq.s32.totalorder %s19, 0
    %p244 = por %p242, %p243
    %p245 = scmp.le.s32.totalorder 1, %s13
    %p246 = scmp.lt.s32.totalorder %s13, 5
    %p247 = pnand %p245, %p246
    %p248 = pneg %p247
    // Predicated region
    $region9: #{resblock_pallas.1} parent=5 // pred_check
      _
    $region10: #{resblock_pallas.1} parent=5 // pred_check_branch
      %250 = sbr.rel (%p247) target = $region12
    $region11: #{resblock_pallas.1} parent=5 // pred_region
      %s251 = ssub.s32 %s13, 1
      // Predicated region
      $region13: #{resblock_pallas.1} parent=11 // pred_check
        %p252 = pneg %p146
      $region14: #{resblock_pallas.1} parent=11 // pred_check_branch
        %254 = sbr.rel (%p252) target = $region16
      $region15: #{resblock_pallas.1} parent=11 // pred_region
        _
      $region16: #{resblock_pallas.1} parent=11 // pred_fallthru
        _
      // Predicated region
      $region17: #{resblock_pallas.1} parent=11 // pred_check
        %p255 = pneg %p167
      $region18: #{resblock_pallas.1} parent=11 // pred_check_branch
        %257 = sbr.rel (%p255) target = $region20
      $region19: #{resblock_pallas.1} parent=11 // pred_region
        _
      $region20: #{resblock_pallas.1} parent=11 // pred_fallthru
        _
      // Predicated region
      $region21: #{resblock_pallas.1} parent=11 // pred_check
        %p258 = pneg %p188
      $region22: #{resblock_pallas.1} parent=11 // pred_check_branch
        %260 = sbr.rel (%p258) target = $region24
      $region23: #{resblock_pallas.1} parent=11 // pred_region
        _
      $region24: #{resblock_pallas.1} parent=11 // pred_fallthru
        _
      // Predicated region
      $region25: #{resblock_pallas.1} parent=11 // pred_check
        %p261 = pneg %p209
      $region26: #{resblock_pallas.1} parent=11 // pred_check_branch
        %263 = sbr.rel (%p261) target = $region28
      $region27: #{resblock_pallas.1} parent=11 // pred_region
        _
      $region28: #{resblock_pallas.1} parent=11 // pred_fallthru
        _
    $region12: #{resblock_pallas.1} parent=5 // pred_fallthru
      _
    %p264 = scmp.lt.s32.totalorder %s13, 4
    // Predicated region
    $region29: #{resblock_pallas.1} parent=5 // pred_check
      %p265 = pneg %p264
    $region30: #{resblock_pallas.1} parent=5 // pred_check_branch
      %267 = sbr.rel (%p265) target = $region32
    $region31: #{resblock_pallas.1} parent=5 // pred_region
      // Predicated region
      $region33: #{resblock_pallas.1} parent=31 // pred_check
        %p268 = pneg %p47
      $region34: #{resblock_pallas.1} parent=31 // pred_check_branch
        %270 = sbr.rel (%p268) target = $region36
      $region35: #{resblock_pallas.1} parent=31 // pred_region
        %s271 = smul.u32 8, %s21
        %p272 = scmp.lt.s32.totalorder %s20, 1
        %s273 = scalar_select %p272, %s20, 1
        %p274 = scmp.lt.s32.totalorder %s271, 15
        %s275 = scalar_select %p274, %s271, 15
        %s276 = smul.addr %s275, 2
        %s277 = smul.addr %s273, 32
        %s278 = sadd.s32 %s276, %s277
        %s279 = smul.addr %s278, 8
        %s280 = scalar_lea.vmem %s0, %s279
        %s281 = smul.u32 8, %s21
      $region36: #{resblock_pallas.1} parent=31 // pred_fallthru
        _
      // Predicated region
      $region37: #{resblock_pallas.1} parent=31 // pred_check
        %p282 = pneg %p83
      $region38: #{resblock_pallas.1} parent=31 // pred_check_branch
        %284 = sbr.rel (%p282) target = $region40
      $region39: #{resblock_pallas.1} parent=31 // pred_region
        %s285 = smul.u32 %s21, 8
        %s286 = ssub.s32 %s285, 1
        %p287 = scmp.gt.s32.totalorder %s286, 0
        %s288 = scalar_select %p287, %s286, 0
        %p289 = scmp.lt.s32.totalorder %s20, 1
        %s290 = scalar_select %p289, %s20, 1
        %p291 = scmp.lt.s32.totalorder %s288, 15
        %s292 = scalar_select %p291, %s288, 15
        %s293 = smul.addr %s292, 2
        %s294 = smul.addr %s290, 32
        %s295 = sadd.s32 %s293, %s294
        %s296 = smul.addr %s295, 8
        %s297 = scalar_lea.vmem %s1, %s296
        %s298 = smul.u32 %s21, 8
        %s299 = ssub.s32 %s298, 1
        %p300 = scmp.gt.s32.totalorder %s299, 0
        %s301 = scalar_select %p300, %s299, 0
      $region40: #{resblock_pallas.1} parent=31 // pred_fallthru
        _
      // Predicated region
      $region41: #{resblock_pallas.1} parent=31 // pred_check
        %p302 = pneg %p119
      $region42: #{resblock_pallas.1} parent=31 // pred_check_branch
        %304 = sbr.rel (%p302) target = $region44
      $region43: #{resblock_pallas.1} parent=31 // pred_region
        %s305 = smul.u32 %s21, 8
        %s306 = sadd.s32 %s305, 8
        %p307 = scmp.lt.s32.totalorder %s306, 15
        %s308 = scalar_select %p307, %s306, 15
        %p309 = scmp.lt.s32.totalorder %s20, 1
        %s310 = scalar_select %p309, %s20, 1
        %p311 = scmp.lt.s32.totalorder %s308, 15
        %s312 = scalar_select %p311, %s308, 15
        %s313 = smul.addr %s312, 2
        %s314 = smul.addr %s310, 32
        %s315 = sadd.s32 %s313, %s314
        %s316 = smul.addr %s315, 8
        %s317 = scalar_lea.vmem %s2, %s316
        %s318 = smul.u32 %s21, 8
        %s319 = sadd.s32 %s318, 8
        %p320 = scmp.lt.s32.totalorder %s319, 15
        %s321 = scalar_select %p320, %s319, 15
      $region44: #{resblock_pallas.1} parent=31 // pred_fallthru
        _
    $region32: #{resblock_pallas.1} parent=5 // pred_fallthru
      _
    %p322 = scmp.le.s32.totalorder 1, %s13
    %p323 = scmp.lt.s32.totalorder %s13, 5
    %p324 = pnand %p322, %p323
    %p325 = pneg %p324
    // Predicated region
    $region45: #{resblock_pallas.1} parent=5 // pred_check
      _
    $region46: #{resblock_pallas.1} parent=5 // pred_check_branch
      %327 = sbr.rel (%p324) target = $region48
    $region47: #{resblock_pallas.1} parent=5 // pred_region
      %s328 = ssub.s32 %s13, 1
      %s329 = smul.u32 8, %s23
      %p330 = scmp.lt.s32.totalorder %s22, 1
      %s331 = scalar_select %p330, %s22, 1
      %p332 = scmp.lt.s32.totalorder %s329, 15
      %s333 = scalar_select %p332, %s329, 15
      %s334 = smul.addr %s333, 2
      %s335 = smul.addr %s331, 32
      %s336 = sadd.s32 %s334, %s335
      %s337 = smul.addr %s336, 8
      %s338 = scalar_lea.vmem %s0, %s337
      %p339 = pneg %p53
      %p340 = pneg %p50
      %s341 = smul.u32 %s23, 8
      %s342 = ssub.s32 %s341, 1
      %p343 = scmp.gt.s32.totalorder %s342, 0
      %s344 = scalar_select %p343, %s342, 0
      %p345 = scmp.lt.s32.totalorder %s22, 1
      %s346 = scalar_select %p345, %s22, 1
      %p347 = scmp.lt.s32.totalorder %s344, 15
      %s348 = scalar_select %p347, %s344, 15
      %s349 = smul.addr %s348, 2
      %s350 = smul.addr %s346, 32
      %s351 = sadd.s32 %s349, %s350
      %s352 = smul.addr %s351, 8
      %s353 = scalar_lea.vmem %s1, %s352
      %p354 = pneg %p89
      %p355 = pneg %p86
      %s356 = smul.u32 %s23, 8
      %s357 = sadd.s32 %s356, 8
      %p358 = scmp.lt.s32.totalorder %s357, 15
      %s359 = scalar_select %p358, %s357, 15
      %p360 = scmp.lt.s32.totalorder %s22, 1
      %s361 = scalar_select %p360, %s22, 1
      %p362 = scmp.lt.s32.totalorder %s359, 15
      %s363 = scalar_select %p362, %s359, 15
      %s364 = smul.addr %s363, 2
      %s365 = smul.addr %s361, 32
      %s366 = sadd.s32 %s364, %s365
      %s367 = smul.addr %s366, 8
      %s368 = scalar_lea.vmem %s2, %s367
      %p369 = pneg %p125
      %p370 = pneg %p122
      %p371 = pneg %p146
      %p372 = pneg %p143
      %p373 = pneg %p167
      %p374 = pneg %p164
      %p375 = pneg %p188
      %p376 = pneg %p185
      %p377 = pneg %p209
      %p378 = pneg %p206
      %p379 = pneg %p237
      %p380 = pneg %p234
      %s381 = smul.u32 8, %s23
      %p382 = scmp.lt.s32.totalorder %s22, 1
      %s383 = scalar_select %p382, %s22, 1
      %p384 = scmp.lt.s32.totalorder %s381, 15
      %s385 = scalar_select %p384, %s381, 15
      %s386 = smul.addr %s385, 2
      %s387 = smul.addr %s383, 32
      %s388 = sadd.s32 %s386, %s387
      %s389 = smul.addr %s388, 8
      %s390 = scalar_lea.vmem %s7, %s389
      %s391 = smul.u32 8, %s23
      %p392 = scmp.lt.s32.totalorder %s22, 1
      %s393 = scalar_select %p392, %s22, 1
      %p394 = scmp.lt.s32.totalorder %s391, 15
      %s395 = scalar_select %p394, %s391, 15
      %s396 = smul.addr %s395, 2
      %s397 = smul.addr %s393, 32
      %s398 = sadd.s32 %s396, %s397
      %s399 = smul.addr %s398, 8
      %s400 = scalar_lea.vmem %s0, %s399
      %s401 = smul.u32 8, %s23
      %s402 = smul.u32 %s23, 8
      %s403 = ssub.s32 %s402, 1
      %p404 = scmp.gt.s32.totalorder %s403, 0
      %s405 = scalar_select %p404, %s403, 0
      %p406 = scmp.lt.s32.totalorder %s22, 1
      %s407 = scalar_select %p406, %s22, 1
      %p408 = scmp.lt.s32.totalorder %s405, 15
      %s409 = scalar_select %p408, %s405, 15
      %s410 = smul.addr %s409, 2
      %s411 = smul.addr %s407, 32
      %s412 = sadd.s32 %s410, %s411
      %s413 = smul.addr %s412, 8
      %s414 = scalar_lea.vmem %s1, %s413
      %s415 = smul.u32 %s23, 8
      %s416 = ssub.s32 %s415, 1
      %p417 = scmp.gt.s32.totalorder %s416, 0
      %s418 = scalar_select %p417, %s416, 0
      %s419 = smul.u32 %s23, 8
      %s420 = sadd.s32 %s419, 8
      %p421 = scmp.lt.s32.totalorder %s420, 15
      %s422 = scalar_select %p421, %s420, 15
      %p423 = scmp.lt.s32.totalorder %s22, 1
      %s424 = scalar_select %p423, %s22, 1
      %p425 = scmp.lt.s32.totalorder %s422, 15
      %s426 = scalar_select %p425, %s422, 15
      %s427 = smul.addr %s426, 2
      %s428 = smul.addr %s424, 32
      %s429 = sadd.s32 %s427, %s428
      %s430 = smul.addr %s429, 8
      %s431 = scalar_lea.vmem %s2, %s430
      %s432 = smul.u32 %s23, 8
      %s433 = sadd.s32 %s432, 8
      %p434 = scmp.lt.s32.totalorder %s433, 15
      %s435 = scalar_select %p434, %s433, 15
      %s436 = smul.u32 8, %s23
      %p437 = scmp.lt.s32.totalorder %s22, 1
      %s438 = scalar_select %p437, %s22, 1
      %p439 = scmp.lt.s32.totalorder %s436, 15
      %s440 = scalar_select %p439, %s436, 15
      %s441 = smul.addr %s440, 2
      %s442 = smul.addr %s438, 32
      %s443 = sadd.s32 %s441, %s442
      %s444 = smul.addr %s443, 8
      %s445 = scalar_lea.vmem %s7, %s444
      %s446 = smul.u32 8, %s23
      %v448 = vld [vmem:[%s400] sm:$0xff]
      %v449 = vld [vmem:[%s400 + $0x8] sm:$0xff]
      %v450 = vld [vmem:[%s400 + $0x10] sm:$0xff]
      %v451 = vld [vmem:[%s400 + $0x18] sm:$0xff]
      %v452 = vld [vmem:[%s400 + $0x20] sm:$0xff]
      %v453 = vld [vmem:[%s400 + $0x28] sm:$0xff]
      %v454 = vld [vmem:[%s400 + $0x30] sm:$0xff]
      %v455 = vld [vmem:[%s400 + $0x38] sm:$0xff]
      %v456 = vld [vmem:[%s400 + $0x40] sm:$0xff]
      %v457 = vld [vmem:[%s400 + $0x48] sm:$0xff]
      %v458 = vld [vmem:[%s400 + $0x50] sm:$0xff]
      %v459 = vld [vmem:[%s400 + $0x58] sm:$0xff]
      %v460 = vld [vmem:[%s400 + $0x60] sm:$0xff]
      %v461 = vld [vmem:[%s400 + $0x68] sm:$0xff]
      %v462 = vld [vmem:[%s400 + $0x70] sm:$0xff]
      %v463 = vld [vmem:[%s400 + $0x78] sm:$0xff]
      %v464 = vld [vmem:[%s414] sm:$0xff]
      %v465 = vld [vmem:[%s414 + $0x8] sm:$0xff]
      %v466 = vld [vmem:[%s431] sm:$0xff]
      %v467 = vld [vmem:[%s431 + $0x8] sm:$0xff]
      %v468 = vpack.c.bf16 %v465, %v464
      %v469 = vpack.c.bf16 %v449, %v448
      %v470 = vpack.c.bf16 %v451, %v450
      %v471 = vpack.c.bf16 %v453, %v452
      %v472 = vpack.c.bf16 %v455, %v454
      %v473 = vpack.c.bf16 %v457, %v456
      %v474 = vpack.c.bf16 %v459, %v458
      %v475 = vpack.c.bf16 %v461, %v460
      %v476 = vpack.c.bf16 %v463, %v462
      %v477 = vpack.c.bf16 %v467, %v466
      %v478 = vld [vmem:[%s3] sm:$0x3]
      %v479 = vld [vmem:[%s4] sm:$0x1]
      %v481 = vlaneseq
      %v482 = vshrl.u32 %v481, 7
      %v483 = vsub.s32 0, %v482
      %v484 = vrot.slane %v479, %v483
      %vm486 = vcmask 31744
      %v488 = vsel %vm486, %v468, 0
      %v491 = vsel %vm486, %v469, 0
      %v494 = vsel %vm486, %v470, 0
      %v497 = vsel %vm486, %v471, 0
      %v500 = vsel %vm486, %v472, 0
      %v503 = vsel %vm486, %v473, 0
      %v506 = vsel %vm486, %v474, 0
      %v509 = vsel %vm486, %v475, 0
      %v512 = vsel %vm486, %v476, 0
      %v515 = vsel %vm486, %v477, 0
      %vm517 = vcmask 1041408
      %v519 = vsel %vm517, %v478, 0
      %521 = vmatprep.subr.bf16.mxu0 0
      %522 = vmatpush1.bf16.msra.mxu0 %v519
      %523 = vmatprep.subr.bf16.mxu0 0
      %524 = vmatpush1.bf16.msra.mxu0 0
      %525 = vmatprep.subr.bf16.mxu0 0
      %526 = vmatpush1.bf16.msra.mxu0 0
      %527 = vmatprep.subr.bf16.mxu0 0
      %528 = vmatpush1.bf16.msra.mxu0 0
      %529 = vmatprep.subr.bf16.mxu0 0
      %530 = vmatpush1.bf16.msra.mxu0 0
      %531 = vmatprep.subr.bf16.mxu0 0
      %532 = vmatpush1.bf16.msra.mxu0 0
      %533 = vmatprep.subr.bf16.mxu0 0
      %534 = vmatpush1.bf16.msra.mxu0 0
      %535 = vmatprep.subr.bf16.mxu0 0
      %536 = vmatpush1.bf16.msra.mxu0 0
      %537 = vmatprep.subr.bf16.mxu0 0
      %538 = vmatpush1.bf16.msra.mxu0 0
      %539 = vmatprep.subr.bf16.mxu0 0
      %540 = vmatpush1.bf16.msra.mxu0 0
      %541 = vmatprep.subr.bf16.mxu0 0
      %542 = vmatpush1.bf16.msra.mxu0 0
      %543 = vmatprep.subr.bf16.mxu0 0
      %544 = vmatpush1.bf16.msra.mxu0 0
      %545 = vmatprep.subr.bf16.mxu0 0
      %546 = vmatpush1.bf16.msra.mxu0 0
      %547 = vmatprep.subr.bf16.mxu0 0
      %548 = vmatpush1.bf16.msra.mxu0 0
      %549 = vmatprep.subr.bf16.mxu0 0
      %550 = vmatpush1.bf16.msra.mxu0 0
      %551 = vmatprep.subr.bf16.mxu0 0
      %552 = vmatpush1.bf16.msra.mxu0 0
      %553 = vmatprep.mubr.bf16.mxu0 0
      %554 = vmatmul.mubr.bf16.gmra.mrb[0].mxu0 %v488
      %v555 = vpop.f32.mrb[0].mxu0
      %v556 = vadd.f32 %v484, %v555
      %v557 = vpop.f32.mrb[0].mxu0
      %v558 = vpop.f32.mrb[0].mxu0
      %v559 = vadd.f32 %v484, %v558
      %v560 = vpop.f32.mrb[0].mxu0
      %561 = vmatprep.mubr.bf16.mxu0 0
      %562 = vmatmul.mubr.bf16.gmra.mrb[0].mxu0 %v491
      %v563 = vpop.f32.mrb[0].mxu0
      %v564 = vadd.f32 %v484, %v563
      %v565 = vpop.f32.mrb[0].mxu0
      %v566 = vpop.f32.mrb[0].mxu0
      %v567 = vadd.f32 %v484, %v566
      %v568 = vpop.f32.mrb[0].mxu0
      %569 = vmatprep.mubr.bf16.mxu0 0
      %570 = vmatmul.mubr.bf16.gmra.mrb[0].mxu0 %v494
      %v571 = vpop.f32.mrb[0].mxu0
      %v572 = vadd.f32 %v484, %v571
      %v573 = vpop.f32.mrb[0].mxu0
      %v574 = vpop.f32.mrb[0].mxu0
      %v575 = vadd.f32 %v484, %v574
      %v576 = vpop.f32.mrb[0].mxu0
      %577 = vmatprep.mubr.bf16.mxu0 0
      %578 = vmatmul.mubr.bf16.gmra.mrb[0].mxu0 %v497
      %v579 = vpop.f32.mrb[0].mxu0
      %v580 = vadd.f32 %v484, %v579
      %v581 = vpop.f32.mrb[0].mxu0
      %v582 = vpop.f32.mrb[0].mxu0
      %v583 = vadd.f32 %v484, %v582
      %v584 = vpop.f32.mrb[0].mxu0
      %585 = vmatprep.mubr.bf16.mxu0 0
      %586 = vmatmul.mubr.bf16.gmra.mrb[0].mxu0 %v500
      %v587 = vpop.f32.mrb[0].mxu0
      %v588 = vadd.f32 %v484, %v587
      %v589 = vpop.f32.mrb[0].mxu0
      %v590 = vpop.f32.mrb[0].mxu0
      %v591 = vadd.f32 %v484, %v590
      %v592 = vpop.f32.mrb[0].mxu0
      %593 = vmatprep.mubr.bf16.mxu0 0
      %594 = vmatmul.mubr.bf16.gmra.mrb[0].mxu0 %v503
      %v595 = vpop.f32.mrb[0].mxu0
      %v596 = vadd.f32 %v484, %v595
      %v597 = vpop.f32.mrb[0].mxu0
      %v598 = vpop.f32.mrb[0].mxu0
      %v599 = vadd.f32 %v484, %v598
      %v600 = vpop.f32.mrb[0].mxu0
      %601 = vmatprep.mubr.bf16.mxu0 0
      %602 = vmatmul.mubr.bf16.gmra.mrb[0].mxu0 %v506
      %v603 = vpop.f32.mrb[0].mxu0
      %v604 = vadd.f32 %v484, %v603
      %v605 = vpop.f32.mrb[0].mxu0
      %v606 = vpop.f32.mrb[0].mxu0
      %v607 = vadd.f32 %v484, %v606
      %v608 = vpop.f32.mrb[0].mxu0
      %609 = vmatprep.mubr.bf16.mxu0 0
      %610 = vmatmul.mubr.bf16.gmra.mrb[0].mxu0 %v509
      %v611 = vpop.f32.mrb[0].mxu0
      %v612 = vadd.f32 %v484, %v611
      %v613 = vpop.f32.mrb[0].mxu0
      %v614 = vpop.f32.mrb[0].mxu0
      %v615 = vadd.f32 %v484, %v614
      %v616 = vpop.f32.mrb[0].mxu0
      %617 = vmatprep.mubr.bf16.mxu0 0
      %618 = vmatmul.mubr.bf16.gmra.mrb[0].mxu0 %v512
      %v619 = vpop.f32.mrb[0].mxu0
      %v620 = vadd.f32 %v484, %v619
      %v621 = vpop.f32.mrb[0].mxu0
      %v622 = vpop.f32.mrb[0].mxu0
      %v623 = vadd.f32 %v484, %v622
      %v624 = vpop.f32.mrb[0].mxu0
      %625 = vmatprep.mubr.bf16.mxu0 0
      %626 = vmatmul.mubr.bf16.gmra.mrb[0].mxu0 %v515
      %v627 = vpop.f32.mrb[0].mxu0
      %v628 = vadd.f32 %v484, %v627
      %v629 = vpop.f32.mrb[0].mxu0
      %v630 = vpop.f32.mrb[0].mxu0
      %v631 = vadd.f32 %v484, %v630
      %v632 = vpop.f32.mrb[0].mxu0
      %633 = vdwg.mxu0
      %v634 = vmul.f32 %v556, 0.1
      %v635 = vmul.f32 %v559, 0.1
      %v636 = vmul.f32 %v564, 0.1
      %v637 = vmul.f32 %v567, 0.1
      %v638 = vmul.f32 %v572, 0.1
      %v639 = vmul.f32 %v575, 0.1
      %v640 = vmul.f32 %v580, 0.1
      %v641 = vmul.f32 %v583, 0.1
      %v642 = vmul.f32 %v588, 0.1
      %v643 = vmul.f32 %v591, 0.1
      %v644 = vmul.f32 %v596, 0.1
      %v645 = vmul.f32 %v599, 0.1
      %v646 = vmul.f32 %v604, 0.1
      %v647 = vmul.f32 %v607, 0.1
      %v648 = vmul.f32 %v612, 0.1
      %v649 = vmul.f32 %v615, 0.1
      %v650 = vmul.f32 %v620, 0.1
      %v651 = vmul.f32 %v623, 0.1
      %v652 = vmul.f32 %v628, 0.1
      %v653 = vmul.f32 %v631, 0.1
      %v654 = vmax.f32 %v556, %v634
      %v655 = vmax.f32 %v559, %v635
      %v656 = vmax.f32 %v564, %v636
      %v657 = vmax.f32 %v567, %v637
      %v658 = vmax.f32 %v572, %v638
      %v659 = vmax.f32 %v575, %v639
      %v660 = vmax.f32 %v580, %v640
      %v661 = vmax.f32 %v583, %v641
      %v662 = vmax.f32 %v588, %v642
      %v663 = vmax.f32 %v591, %v643
      %v664 = vmax.f32 %v596, %v644
      %v665 = vmax.f32 %v599, %v645
      %v666 = vmax.f32 %v604, %v646
      %v667 = vmax.f32 %v607, %v647
      %v668 = vmax.f32 %v612, %v648
      %v669 = vmax.f32 %v615, %v649
      %v670 = vmax.f32 %v620, %v650
      %v671 = vmax.f32 %v623, %v651
      %v672 = vmax.f32 %v628, %v652
      %v673 = vmax.f32 %v631, %v653
      %v674 = vlaneseq
      %v675 = vshrl.u32 %v674, 7
      %v676 = vadd.s32 %v675, 8
      %v677 = vadd.s32 %v675, 16
      %v678 = vadd.s32 %v675, 24
      %v679 = vadd.s32 %v675, 32
      %v680 = vadd.s32 %v675, 40
      %v681 = vadd.s32 %v675, 48
      %v682 = vadd.s32 %v675, 56
      %v683 = vadd.s32 %v675, 64
      %v684 = vadd.s32 %v675, 72
      %v685 = vadd.s32 %v675, 80
      %v686 = vadd.s32 %v675, 88
      %v687 = vadd.s32 %v675, 96
      %v688 = vadd.s32 %v675, 104
      %v689 = vadd.s32 %v675, 112
      %v690 = vadd.s32 %v675, 120
      %v691 = vadd.s32 %v675, 128
      %v692 = vadd.s32 %v675, 136
      %v693 = vadd.s32 %v675, 144
      %v694 = vadd.s32 %v675, 152
      %p695 = scmp.eq.s32.totalorder %s23, 0
      %vm696 = vcmp.lt.s32.totalorder %v675, 16
      %vm697 = vcmp.lt.s32.totalorder %v676, 16
      %vm698 = vcmp.lt.s32.totalorder %v677, 16
      %vm699 = vcmp.lt.s32.totalorder %v678, 16
      %vm700 = vcmp.lt.s32.totalorder %v679, 16
      %vm701 = vcmp.lt.s32.totalorder %v680, 16
      %vm702 = vcmp.lt.s32.totalorder %v681, 16
      %vm703 = vcmp.lt.s32.totalorder %v682, 16
      %vm704 = vcmp.lt.s32.totalorder %v683, 16
      %vm705 = vcmp.lt.s32.totalorder %v684, 16
      %vm706 = vcmp.lt.s32.totalorder %v685, 16
      %vm707 = vcmp.lt.s32.totalorder %v686, 16
      %vm708 = vcmp.lt.s32.totalorder %v687, 16
      %vm709 = vcmp.lt.s32.totalorder %v688, 16
      %vm710 = vcmp.lt.s32.totalorder %v689, 16
      %vm711 = vcmp.lt.s32.totalorder %v690, 16
      %vm712 = vcmp.lt.s32.totalorder %v691, 16
      %vm713 = vcmp.lt.s32.totalorder %v692, 16
      %vm714 = vcmp.lt.s32.totalorder %v693, 16
      %vm715 = vcmp.lt.s32.totalorder %v694, 16
      %s716 = scalar_select %p695, 1, 0
      %v717 = vstv %s716
      %vm718 = vcmp.eq.s32.totalorder %v717, 1
      %vm719 = vmand %vm718, %vm696
      %vm720 = vmand %vm718, %vm697
      %vm721 = vmand %vm718, %vm698
      %vm722 = vmand %vm718, %vm699
      %vm723 = vmand %vm718, %vm700
      %vm724 = vmand %vm718, %vm701
      %vm725 = vmand %vm718, %vm702
      %vm726 = vmand %vm718, %vm703
      %vm727 = vmand %vm718, %vm704
      %vm728 = vmand %vm718, %vm705
      %vm729 = vmand %vm718, %vm706
      %vm730 = vmand %vm718, %vm707
      %vm731 = vmand %vm718, %vm708
      %vm732 = vmand %vm718, %vm709
      %vm733 = vmand %vm718, %vm710
      %vm734 = vmand %vm718, %vm711
      %vm735 = vmand %vm718, %vm712
      %vm736 = vmand %vm718, %vm713
      %vm737 = vmand %vm718, %vm714
      %vm738 = vmand %vm718, %vm715
      %p739 = scmp.eq.s32.totalorder %s23, 1
      %vm740 = vcmp.ge.s32.totalorder %v675, 144
      %vm741 = vcmp.ge.s32.totalorder %v676, 144
      %vm742 = vcmp.ge.s32.totalorder %v677, 144
      %vm743 = vcmp.ge.s32.totalorder %v678, 144
      %vm744 = vcmp.ge.s32.totalorder %v679, 144
      %vm745 = vcmp.ge.s32.totalorder %v680, 144
      %vm746 = vcmp.ge.s32.totalorder %v681, 144
      %vm747 = vcmp.ge.s32.totalorder %v682, 144
      %vm748 = vcmp.ge.s32.totalorder %v683, 144
      %vm749 = vcmp.ge.s32.totalorder %v684, 144
      %vm750 = vcmp.ge.s32.totalorder %v685, 144
      %vm751 = vcmp.ge.s32.totalorder %v686, 144
      %vm752 = vcmp.ge.s32.totalorder %v687, 144
      %vm753 = vcmp.ge.s32.totalorder %v688, 144
      %vm754 = vcmp.ge.s32.totalorder %v689, 144
      %vm755 = vcmp.ge.s32.totalorder %v690, 144
      %vm756 = vcmp.ge.s32.totalorder %v691, 144
      %vm757 = vcmp.ge.s32.totalorder %v692, 144
      %vm758 = vcmp.ge.s32.totalorder %v693, 144
      %vm759 = vcmp.ge.s32.totalorder %v694, 144
      %s760 = scalar_select %p739, 1, 0
      %v761 = vstv %s760
      %vm762 = vcmp.eq.s32.totalorder %v761, 1
      %vm763 = vmand %vm762, %vm740
      %vm764 = vmand %vm762, %vm741
      %vm765 = vmand %vm762, %vm742
      %vm766 = vmand %vm762, %vm743
      %vm767 = vmand %vm762, %vm744
      %vm768 = vmand %vm762, %vm745
      %vm769 = vmand %vm762, %vm746
      %vm770 = vmand %vm762, %vm747
      %vm771 = vmand %vm762, %vm748
      %vm772 = vmand %vm762, %vm749
      %vm773 = vmand %vm762, %vm750
      %vm774 = vmand %vm762, %vm751
      %vm775 = vmand %vm762, %vm752
      %vm776 = vmand %vm762, %vm753
      %vm777 = vmand %vm762, %vm754
      %vm778 = vmand %vm762, %vm755
      %vm779 = vmand %vm762, %vm756
      %vm780 = vmand %vm762, %vm757
      %vm781 = vmand %vm762, %vm758
      %vm782 = vmand %vm762, %vm759
      %vm783 = vmor %vm719, %vm763
      %vm784 = vmor %vm720, %vm764
      %vm785 = vmor %vm721, %vm765
      %vm786 = vmor %vm722, %vm766
      %vm787 = vmor %vm723, %vm767
      %vm788 = vmor %vm724, %vm768
      %vm789 = vmor %vm725, %vm769
      %vm790 = vmor %vm726, %vm770
      %vm791 = vmor %vm727, %vm771
      %vm792 = vmor %vm728, %vm772
      %vm793 = vmor %vm729, %vm773
      %vm794 = vmor %vm730, %vm774
      %vm795 = vmor %vm731, %vm775
      %vm796 = vmor %vm732, %vm776
      %vm797 = vmor %vm733, %vm777
      %vm798 = vmor %vm734, %vm778
      %vm799 = vmor %vm735, %vm779
      %vm800 = vmor %vm736, %vm780
      %vm801 = vmor %vm737, %vm781
      %vm802 = vmor %vm738, %vm782
      %v803 = vsel %vm783, 0.0, %v654
      %v804 = vsel %vm784, 0.0, %v655
      %v805 = vsel %vm785, 0.0, %v656
      %v806 = vsel %vm786, 0.0, %v657
      %v807 = vsel %vm787, 0.0, %v658
      %v808 = vsel %vm788, 0.0, %v659
      %v809 = vsel %vm789, 0.0, %v660
      %v810 = vsel %vm790, 0.0, %v661
      %v811 = vsel %vm791, 0.0, %v662
      %v812 = vsel %vm792, 0.0, %v663
      %v813 = vsel %vm793, 0.0, %v664
      %v814 = vsel %vm794, 0.0, %v665
      %v815 = vsel %vm795, 0.0, %v666
      %v816 = vsel %vm796, 0.0, %v667
      %v817 = vsel %vm797, 0.0, %v668
      %v818 = vsel %vm798, 0.0, %v669
      %v819 = vsel %vm799, 0.0, %v670
      %v820 = vsel %vm800, 0.0, %v671
      %v821 = vsel %vm801, 0.0, %v672
      %v822 = vsel %vm802, 0.0, %v673
      %vm823 = vcmask 15360
      %824 = vst.msk [vmem:[#allocation2 + $0x2] sm:$0xff] %vm823, %v803
      %825 = vst.msk [vmem:[#allocation2 + $0xa] sm:$0xff] %vm823, %v804
      %826 = vst.msk [vmem:[#allocation2 + $0x1a] sm:$0xff] %vm823, %v805
      %827 = vst.msk [vmem:[#allocation2 + $0x22] sm:$0xff] %vm823, %v806
      %828 = vst.msk [vmem:[#allocation2 + $0x32] sm:$0xff] %vm823, %v807
      %829 = vst.msk [vmem:[#allocation2 + $0x3a] sm:$0xff] %vm823, %v808
      %830 = vst.msk [vmem:[#allocation2 + $0x4a] sm:$0xff] %vm823, %v809
      %831 = vst.msk [vmem:[#allocation2 + $0x52] sm:$0xff] %vm823, %v810
      %832 = vst.msk [vmem:[#allocation2 + $0x62] sm:$0xff] %vm823, %v811
      %833 = vst.msk [vmem:[#allocation2 + $0x6a] sm:$0xff] %vm823, %v812
      %834 = vst.msk [vmem:[#allocation2 + $0x7a] sm:$0xff] %vm823, %v813
      %835 = vst.msk [vmem:[#allocation2 + $0x82] sm:$0xff] %vm823, %v814
      %836 = vst.msk [vmem:[#allocation2 + $0x92] sm:$0xff] %vm823, %v815
      %837 = vst.msk [vmem:[#allocation2 + $0x9a] sm:$0xff] %vm823, %v816
      %838 = vst.msk [vmem:[#allocation2 + $0xaa] sm:$0xff] %vm823, %v817
      %839 = vst.msk [vmem:[#allocation2 + $0xb2] sm:$0xff] %vm823, %v818
      %840 = vst.msk [vmem:[#allocation2 + $0xc2] sm:$0xff] %vm823, %v819
      %841 = vst.msk [vmem:[#allocation2 + $0xca] sm:$0xff] %vm823, %v820
      %842 = vst.msk [vmem:[#allocation2 + $0xda] sm:$0xff] %vm823, %v821
      %843 = vst.msk [vmem:[#allocation2 + $0xe2] sm:$0xff] %vm823, %v822
      %864 = vrot.lane.b32.xlu0 %v803, 2
      %v865 = vpop.permute.xlu0 %864
      %866 = vrot.lane.b32.xlu0 %v804, 2
      %v867 = vpop.permute.xlu0 %866
      %868 = vrot.lane.b32.xlu0 %v805, 2
      %v869 = vpop.permute.xlu0 %868
      %870 = vrot.lane.b32.xlu0 %v806, 2
      %v871 = vpop.permute.xlu0 %870
      %872 = vrot.lane.b32.xlu0 %v807, 2
      %v873 = vpop.permute.xlu0 %872
      %874 = vrot.lane.b32.xlu0 %v808, 2
      %v875 = vpop.permute.xlu0 %874
      %876 = vrot.lane.b32.xlu0 %v809, 2
      %v877 = vpop.permute.xlu0 %876
      %878 = vrot.lane.b32.xlu0 %v810, 2
      %v879 = vpop.permute.xlu0 %878
      %880 = vrot.lane.b32.xlu0 %v811, 2
      %v881 = vpop.permute.xlu0 %880
      %882 = vrot.lane.b32.xlu0 %v812, 2
      %v883 = vpop.permute.xlu0 %882
      %884 = vrot.lane.b32.xlu0 %v813, 2
      %v885 = vpop.permute.xlu0 %884
      %886 = vrot.lane.b32.xlu0 %v814, 2
      %v887 = vpop.permute.xlu0 %886
      %888 = vrot.lane.b32.xlu0 %v815, 2
      %v889 = vpop.permute.xlu0 %888
      %890 = vrot.lane.b32.xlu0 %v816, 2
      %v891 = vpop.permute.xlu0 %890
      %892 = vrot.lane.b32.xlu0 %v817, 2
      %v893 = vpop.permute.xlu0 %892
      %894 = vrot.lane.b32.xlu0 %v818, 2
      %v895 = vpop.permute.xlu0 %894
      %896 = vrot.lane.b32.xlu0 %v819, 2
      %v897 = vpop.permute.xlu0 %896
      %898 = vrot.lane.b32.xlu0 %v820, 2
      %v899 = vpop.permute.xlu0 %898
      %900 = vrot.lane.b32.xlu0 %v821, 2
      %v901 = vpop.permute.xlu0 %900
      %902 = vrot.lane.b32.xlu0 %v822, 2
      %v903 = vpop.permute.xlu0 %902
      %vm924 = vcmask 31760
      %925 = vst.msk [vmem:[#allocation2 + $0x1] sm:$0xff] %vm924, %v865
      %926 = vst.msk [vmem:[#allocation2 + $0x9] sm:$0xff] %vm924, %v867
      %927 = vst.msk [vmem:[#allocation2 + $0x19] sm:$0xff] %vm924, %v869
      %928 = vst.msk [vmem:[#allocation2 + $0x21] sm:$0xff] %vm924, %v871
      %929 = vst.msk [vmem:[#allocation2 + $0x31] sm:$0xff] %vm924, %v873
      %930 = vst.msk [vmem:[#allocation2 + $0x39] sm:$0xff] %vm924, %v875
      %931 = vst.msk [vmem:[#allocation2 + $0x49] sm:$0xff] %vm924, %v877
      %932 = vst.msk [vmem:[#allocation2 + $0x51] sm:$0xff] %vm924, %v879
      %933 = vst.msk [vmem:[#allocation2 + $0x61] sm:$0xff] %vm924, %v881
      %934 = vst.msk [vmem:[#allocation2 + $0x69] sm:$0xff] %vm924, %v883
      %935 = vst.msk [vmem:[#allocation2 + $0x79] sm:$0xff] %vm924, %v885
      %936 = vst.msk [vmem:[#allocation2 + $0x81] sm:$0xff] %vm924, %v887
      %937 = vst.msk [vmem:[#allocation2 + $0x91] sm:$0xff] %vm924, %v889
      %938 = vst.msk [vmem:[#allocation2 + $0x99] sm:$0xff] %vm924, %v891
      %939 = vst.msk [vmem:[#allocation2 + $0xa9] sm:$0xff] %vm924, %v893
      %940 = vst.msk [vmem:[#allocation2 + $0xb1] sm:$0xff] %vm924, %v895
      %941 = vst.msk [vmem:[#allocation2 + $0xc1] sm:$0xff] %vm924, %v897
      %942 = vst.msk [vmem:[#allocation2 + $0xc9] sm:$0xff] %vm924, %v899
      %943 = vst.msk [vmem:[#allocation2 + $0xd9] sm:$0xff] %vm924, %v901
      %944 = vst.msk [vmem:[#allocation2 + $0xe1] sm:$0xff] %vm924, %v903
      %945 = vrot.lane.b32.xlu0 %v803, 4
      %v946 = vpop.permute.xlu0 %945
      %947 = vrot.lane.b32.xlu0 %v804, 4
      %v948 = vpop.permute.xlu0 %947
      %949 = vrot.lane.b32.xlu0 %v805, 4
      %v950 = vpop.permute.xlu0 %949
      %951 = vrot.lane.b32.xlu0 %v806, 4
      %v952 = vpop.permute.xlu0 %951
      %953 = vrot.lane.b32.xlu0 %v807, 4
      %v954 = vpop.permute.xlu0 %953
      %955 = vrot.lane.b32.xlu0 %v808, 4
      %v956 = vpop.permute.xlu0 %955
      %957 = vrot.lane.b32.xlu0 %v809, 4
      %v958 = vpop.permute.xlu0 %957
      %959 = vrot.lane.b32.xlu0 %v810, 4
      %v960 = vpop.permute.xlu0 %959
      %961 = vrot.lane.b32.xlu0 %v811, 4
      %v962 = vpop.permute.xlu0 %961
      %963 = vrot.lane.b32.xlu0 %v812, 4
      %v964 = vpop.permute.xlu0 %963
      %965 = vrot.lane.b32.xlu0 %v813, 4
      %v966 = vpop.permute.xlu0 %965
      %967 = vrot.lane.b32.xlu0 %v814, 4
      %v968 = vpop.permute.xlu0 %967
      %969 = vrot.lane.b32.xlu0 %v815, 4
      %v970 = vpop.permute.xlu0 %969
      %971 = vrot.lane.b32.xlu0 %v816, 4
      %v972 = vpop.permute.xlu0 %971
      %973 = vrot.lane.b32.xlu0 %v817, 4
      %v974 = vpop.permute.xlu0 %973
      %975 = vrot.lane.b32.xlu0 %v818, 4
      %v976 = vpop.permute.xlu0 %975
      %977 = vrot.lane.b32.xlu0 %v819, 4
      %v978 = vpop.permute.xlu0 %977
      %979 = vrot.lane.b32.xlu0 %v820, 4
      %v980 = vpop.permute.xlu0 %979
      %981 = vrot.lane.b32.xlu0 %v821, 4
      %v982 = vpop.permute.xlu0 %981
      %983 = vrot.lane.b32.xlu0 %v822, 4
      %v984 = vpop.permute.xlu0 %983
      %vm1005 = vcmask 48160
      %1006 = vst.msk [vmem:[#allocation2] sm:$0xff] %vm1005, %v946
      %1007 = vst.msk [vmem:[#allocation2 + $0x8] sm:$0xff] %vm1005, %v948
      %1008 = vst.msk [vmem:[#allocation2 + $0x18] sm:$0xff] %vm1005, %v950
      %1009 = vst.msk [vmem:[#allocation2 + $0x20] sm:$0xff] %vm1005, %v952
      %1010 = vst.msk [vmem:[#allocation2 + $0x30] sm:$0xff] %vm1005, %v954
      %1011 = vst.msk [vmem:[#allocation2 + $0x38] sm:$0xff] %vm1005, %v956
      %1012 = vst.msk [vmem:[#allocation2 + $0x48] sm:$0xff] %vm1005, %v958
      %1013 = vst.msk [vmem:[#allocation2 + $0x50] sm:$0xff] %vm1005, %v960
      %1014 = vst.msk [vmem:[#allocation2 + $0x60] sm:$0xff] %vm1005, %v962
      %1015 = vst.msk [vmem:[#allocation2 + $0x68] sm:$0xff] %vm1005, %v964
      %1016 = vst.msk [vmem:[#allocation2 + $0x78] sm:$0xff] %vm1005, %v966
      %1017 = vst.msk [vmem:[#allocation2 + $0x80] sm:$0xff] %vm1005, %v968
      %1018 = vst.msk [vmem:[#allocation2 + $0x90] sm:$0xff] %vm1005, %v970
      %1019 = vst.msk [vmem:[#allocation2 + $0x98] sm:$0xff] %vm1005, %v972
      %1020 = vst.msk [vmem:[#allocation2 + $0xa8] sm:$0xff] %vm1005, %v974
      %1021 = vst.msk [vmem:[#allocation2 + $0xb0] sm:$0xff] %vm1005, %v976
      %1022 = vst.msk [vmem:[#allocation2 + $0xc0] sm:$0xff] %vm1005, %v978
      %1023 = vst.msk [vmem:[#allocation2 + $0xc8] sm:$0xff] %vm1005, %v980
      %1024 = vst.msk [vmem:[#allocation2 + $0xd8] sm:$0xff] %vm1005, %v982
      %1025 = vst.msk [vmem:[#allocation2 + $0xe0] sm:$0xff] %vm1005, %v984
      %vm1026 = vcmask 8192
      %1027 = vst.msk [vmem:[#allocation2 + $0x1] sm:$0x1] %vm1026, 0.0
      %1028 = vst.msk [vmem:[#allocation2 + $0x19] sm:$0x1] %vm1026, 0.0
      %1029 = vst.msk [vmem:[#allocation2 + $0x31] sm:$0x1] %vm1026, 0.0
      %1030 = vst.msk [vmem:[#allocation2 + $0x49] sm:$0x1] %vm1026, 0.0
      %1031 = vst.msk [vmem:[#allocation2 + $0x61] sm:$0x1] %vm1026, 0.0
      %1032 = vst.msk [vmem:[#allocation2 + $0x79] sm:$0x1] %vm1026, 0.0
      %1033 = vst.msk [vmem:[#allocation2 + $0x91] sm:$0x1] %vm1026, 0.0
      %1034 = vst.msk [vmem:[#allocation2 + $0xa9] sm:$0x1] %vm1026, 0.0
      %1035 = vst.msk [vmem:[#allocation2 + $0xc1] sm:$0x1] %vm1026, 0.0
      %1036 = vst.msk [vmem:[#allocation2 + $0xd9] sm:$0x1] %vm1026, 0.0
      %vm1037 = vcmask 40992
      %1038 = vst.msk [vmem:[#allocation2 + $0x10] sm:$0x1] %vm1037, 0.0
      %1039 = vst.msk [vmem:[#allocation2 + $0x28] sm:$0x1] %vm1037, 0.0
      %1040 = vst.msk [vmem:[#allocation2 + $0x40] sm:$0x1] %vm1037, 0.0
      %1041 = vst.msk [vmem:[#allocation2 + $0x58] sm:$0x1] %vm1037, 0.0
      %1042 = vst.msk [vmem:[#allocation2 + $0x70] sm:$0x1] %vm1037, 0.0
      %1043 = vst.msk [vmem:[#allocation2 + $0x88] sm:$0x1] %vm1037, 0.0
      %1044 = vst.msk [vmem:[#allocation2 + $0xa0] sm:$0x1] %vm1037, 0.0
      %1045 = vst.msk [vmem:[#allocation2 + $0xb8] sm:$0x1] %vm1037, 0.0
      %1046 = vst.msk [vmem:[#allocation2 + $0xd0] sm:$0x1] %vm1037, 0.0
      %1047 = vst.msk [vmem:[#allocation2 + $0xe8] sm:$0x1] %vm1037, 0.0
      %v1048 = vld [vmem:[#allocation2 + $0x1] sm:$0xff]
      %v1049 = vld [vmem:[#allocation2 + $0x9] sm:$0xff]
      %v1050 = vld [vmem:[#allocation2 + $0x19] sm:$0xff]
      %v1051 = vld [vmem:[#allocation2 + $0x21] sm:$0xff]
      %v1052 = vld [vmem:[#allocation2 + $0x31] sm:$0xff]
      %v1053 = vld [vmem:[#allocation2 + $0x39] sm:$0xff]
      %v1054 = vld [vmem:[#allocation2 + $0x49] sm:$0xff]
      %v1055 = vld [vmem:[#allocation2 + $0x51] sm:$0xff]
      %v1056 = vld [vmem:[#allocation2 + $0x61] sm:$0xff]
      %v1057 = vld [vmem:[#allocation2 + $0x69] sm:$0xff]
      %v1058 = vld [vmem:[#allocation2 + $0x79] sm:$0xff]
      %v1059 = vld [vmem:[#allocation2 + $0x81] sm:$0xff]
      %v1060 = vld [vmem:[#allocation2 + $0x91] sm:$0xff]
      %v1061 = vld [vmem:[#allocation2 + $0x99] sm:$0xff]
      %v1062 = vld [vmem:[#allocation2 + $0xa9] sm:$0xff]
      %v1063 = vld [vmem:[#allocation2 + $0xb1] sm:$0xff]
      %v1064 = vpack.c.bf16 %v1049, %v1048
      %v1065 = vpack.c.bf16 %v1051, %v1050
      %v1066 = vpack.c.bf16 %v1053, %v1052
      %v1067 = vpack.c.bf16 %v1055, %v1054
      %v1068 = vpack.c.bf16 %v1057, %v1056
      %v1069 = vpack.c.bf16 %v1059, %v1058
      %v1070 = vpack.c.bf16 %v1061, %v1060
      %v1071 = vpack.c.bf16 %v1063, %v1062
      %v1072 = vld [vmem:[%s5] sm:$0x7]
      %s1073 = scalar_lea.vmem [#allocation2], 24
      %v1074 = vld [vmem:[%s1073 + $0x1] sm:$0xff]
      %v1075 = vld [vmem:[%s1073 + $0x9] sm:$0xff]
      %v1076 = vld [vmem:[%s1073 + $0x19] sm:$0xff]
      %v1077 = vld [vmem:[%s1073 + $0x21] sm:$0xff]
      %v1078 = vld [vmem:[%s1073 + $0x31] sm:$0xff]
      %v1079 = vld [vmem:[%s1073 + $0x39] sm:$0xff]
      %v1080 = vld [vmem:[%s1073 + $0x49] sm:$0xff]
      %v1081 = vld [vmem:[%s1073 + $0x51] sm:$0xff]
      %v1082 = vld [vmem:[%s1073 + $0x61] sm:$0xff]
      %v1083 = vld [vmem:[%s1073 + $0x69] sm:$0xff]
      %v1084 = vld [vmem:[%s1073 + $0x79] sm:$0xff]
      %v1085 = vld [vmem:[%s1073 + $0x81] sm:$0xff]
      %v1086 = vld [vmem:[%s1073 + $0x91] sm:$0xff]
      %v1087 = vld [vmem:[%s1073 + $0x99] sm:$0xff]
      %v1088 = vld [vmem:[%s1073 + $0xa9] sm:$0xff]
      %v1089 = vld [vmem:[%s1073 + $0xb1] sm:$0xff]
      %v1090 = vpack.c.bf16 %v1075, %v1074
      %v1091 = vpack.c.bf16 %v1077, %v1076
      %v1092 = vpack.c.bf16 %v1079, %v1078
      %v1093 = vpack.c.bf16 %v1081, %v1080
      %v1094 = vpack.c.bf16 %v1083, %v1082
      %v1095 = vpack.c.bf16 %v1085, %v1084
      %v1096 = vpack.c.bf16 %v1087, %v1086
      %v1097 = vpack.c.bf16 %v1089, %v1088
      %s1098 = scalar_lea.vmem %s5, 4
      %v1099 = vld [vmem:[%s1098] sm:$0x7]
      %vm1100 = vcmask 48128
      %v1102 = vsel %vm1100, %v1090, 0
      %v1105 = vsel %vm1100, %v1091, 0
      %v1108 = vsel %vm1100, %v1092, 0
      %v1111 = vsel %vm1100, %v1093, 0
      %v1114 = vsel %vm1100, %v1094, 0
      %v1117 = vsel %vm1100, %v1095, 0
      %v1120 = vsel %vm1100, %v1096, 0
      %v1123 = vsel %vm1100, %v1097, 0
      %vm1125 = vcmask 1042432
      %v1127 = vsel %vm1125, %v1099, 0
      %1129 = vmatprep.subr.bf16.mxu0 0
      %1130 = vmatpush1.bf16.msra.mxu0 %v1127
      %1131 = vmatprep.subr.bf16.mxu0 0
      %1132 = vmatpush1.bf16.msra.mxu0 0
      %1133 = vmatprep.subr.bf16.mxu0 0
      %1134 = vmatpush1.bf16.msra.mxu0 0
      %1135 = vmatprep.subr.bf16.mxu0 0
      %1136 = vmatpush1.bf16.msra.mxu0 0
      %1137 = vmatprep.subr.bf16.mxu0 0
      %1138 = vmatpush1.bf16.msra.mxu0 0
      %1139 = vmatprep.subr.bf16.mxu0 0
      %1140 = vmatpush1.bf16.msra.mxu0 0
      %1141 = vmatprep.subr.bf16.mxu0 0
      %1142 = vmatpush1.bf16.msra.mxu0 0
      %1143 = vmatprep.subr.bf16.mxu0 0
      %1144 = vmatpush1.bf16.msra.mxu0 0
      %1145 = vmatprep.subr.bf16.mxu0 0
      %1146 = vmatpush1.bf16.msra.mxu0 0
      %1147 = vmatprep.subr.bf16.mxu0 0
      %1148 = vmatpush1.bf16.msra.mxu0 0
      %1149 = vmatprep.subr.bf16.mxu0 0
      %1150 = vmatpush1.bf16.msra.mxu0 0
      %1151 = vmatprep.subr.bf16.mxu0 0
      %1152 = vmatpush1.bf16.msra.mxu0 0
      %1153 = vmatprep.subr.bf16.mxu0 0
      %1154 = vmatpush1.bf16.msra.mxu0 0
      %1155 = vmatprep.subr.bf16.mxu0 0
      %1156 = vmatpush1.bf16.msra.mxu0 0
      %1157 = vmatprep.subr.bf16.mxu0 0
      %1158 = vmatpush1.bf16.msra.mxu0 0
      %1159 = vmatprep.subr.bf16.mxu0 0
      %1160 = vmatpush1.bf16.msra.mxu0 0
      %1161 = vmatprep.mubr.bf16.mxu0 0
      %1162 = vmatmul.mubr.bf16.gmra.mrb[0].mxu0 %v1102
      %v1163 = vpop.f32.mrb[0].mxu0
      %v1164 = vadd.f32 0.0, %v1163
      %v1165 = vpop.f32.mrb[0].mxu0
      %v1166 = vpop.f32.mrb[0].mxu0
      %v1167 = vadd.f32 0.0, %v1166
      %v1168 = vpop.f32.mrb[0].mxu0
      %1169 = vmatprep.mubr.bf16.mxu0 0
      %1170 = vmatmul.mubr.bf16.gmra.mrb[0].mxu0 %v1105
      %v1171 = vpop.f32.mrb[0].mxu0
      %v1172 = vadd.f32 0.0, %v1171
      %v1173 = vpop.f32.mrb[0].mxu0
      %v1174 = vpop.f32.mrb[0].mxu0
      %v1175 = vadd.f32 0.0, %v1174
      %v1176 = vpop.f32.mrb[0].mxu0
      %1177 = vmatprep.mubr.bf16.mxu0 0
      %1178 = vmatmul.mubr.bf16.gmra.mrb[0].mxu0 %v1108
      %v1179 = vpop.f32.mrb[0].mxu0
      %v1180 = vadd.f32 0.0, %v1179
      %v1181 = vpop.f32.mrb[0].mxu0
      %v1182 = vpop.f32.mrb[0].mxu0
      %v1183 = vadd.f32 0.0, %v1182
      %v1184 = vpop.f32.mrb[0].mxu0
      %1185 = vmatprep.mubr.bf16.mxu0 0
      %1186 = vmatmul.mubr.bf16.gmra.mrb[0].mxu0 %v1111
      %v1187 = vpop.f32.mrb[0].mxu0
      %v1188 = vadd.f32 0.0, %v1187
      %v1189 = vpop.f32.mrb[0].mxu0
      %v1190 = vpop.f32.mrb[0].mxu0
      %v1191 = vadd.f32 0.0, %v1190
      %v1192 = vpop.f32.mrb[0].mxu0
      %1193 = vmatprep.mubr.bf16.mxu0 0
      %1194 = vmatmul.mubr.bf16.gmra.mrb[0].mxu0 %v1114
      %v1195 = vpop.f32.mrb[0].mxu0
      %v1196 = vadd.f32 0.0, %v1195
      %v1197 = vpop.f32.mrb[0].mxu0
      %v1198 = vpop.f32.mrb[0].mxu0
      %v1199 = vadd.f32 0.0, %v1198
      %v1200 = vpop.f32.mrb[0].mxu0
      %1201 = vmatprep.mubr.bf16.mxu0 0
      %1202 = vmatmul.mubr.bf16.gmra.mrb[0].mxu0 %v1117
      %v1203 = vpop.f32.mrb[0].mxu0
      %v1204 = vadd.f32 0.0, %v1203
      %v1205 = vpop.f32.mrb[0].mxu0
      %v1206 = vpop.f32.mrb[0].mxu0
      %v1207 = vadd.f32 0.0, %v1206
      %v1208 = vpop.f32.mrb[0].mxu0
      %1209 = vmatprep.mubr.bf16.mxu0 0
      %1210 = vmatmul.mubr.bf16.gmra.mrb[0].mxu0 %v1120
      %v1211 = vpop.f32.mrb[0].mxu0
      %v1212 = vadd.f32 0.0, %v1211
      %v1213 = vpop.f32.mrb[0].mxu0
      %v1214 = vpop.f32.mrb[0].mxu0
      %v1215 = vadd.f32 0.0, %v1214
      %v1216 = vpop.f32.mrb[0].mxu0
      %1217 = vmatprep.mubr.bf16.mxu0 0
      %1218 = vmatmul.mubr.bf16.gmra.mrb[0].mxu0 %v1123
      %v1219 = vpop.f32.mrb[0].mxu0
      %v1220 = vadd.f32 0.0, %v1219
      %v1221 = vpop.f32.mrb[0].mxu0
      %v1222 = vpop.f32.mrb[0].mxu0
      %v1223 = vadd.f32 0.0, %v1222
      %v1224 = vpop.f32.mrb[0].mxu0
      %1225 = vdwg.mxu0
      %v1227 = vsel %vm1100, %v1064, 0
      %v1230 = vsel %vm1100, %v1065, 0
      %v1233 = vsel %vm1100, %v1066, 0
      %v1236 = vsel %vm1100, %v1067, 0
      %v1239 = vsel %vm1100, %v1068, 0
      %v1242 = vsel %vm1100, %v1069, 0
      %v1245 = vsel %vm1100, %v1070, 0
      %v1248 = vsel %vm1100, %v1071, 0
      %v1251 = vsel %vm1125, %v1072, 0
      %1253 = vmatprep.subr.bf16.mxu0 0
      %1254 = vmatpush1.bf16.msra.mxu0 %v1251
      %1255 = vmatprep.subr.bf16.mxu0 0
      %1256 = vmatpush1.bf16.msra.mxu0 0
      %1257 = vmatprep.subr.bf16.mxu0 0
      %1258 = vmatpush1.bf16.msra.mxu0 0
      %1259 = vmatprep.subr.bf16.mxu0 0
      %1260 = vmatpush1.bf16.msra.mxu0 0
      %1261 = vmatprep.subr.bf16.mxu0 0
      %1262 = vmatpush1.bf16.msra.mxu0 0
      %1263 = vmatprep.subr.bf16.mxu0 0
      %1264 = vmatpush1.bf16.msra.mxu0 0
      %1265 = vmatprep.subr.bf16.mxu0 0
      %1266 = vmatpush1.bf16.msra.mxu0 0
      %1267 = vmatprep.subr.bf16.mxu0 0
      %1268 = vmatpush1.bf16.msra.mxu0 0
      %1269 = vmatprep.subr.bf16.mxu0 0
      %1270 = vmatpush1.bf16.msra.mxu0 0
      %1271 = vmatprep.subr.bf16.mxu0 0
      %1272 = vmatpush1.bf16.msra.mxu0 0
      %1273 = vmatprep.subr.bf16.mxu0 0
      %1274 = vmatpush1.bf16.msra.mxu0 0
      %1275 = vmatprep.subr.bf16.mxu0 0
      %1276 = vmatpush1.bf16.msra.mxu0 0
      %1277 = vmatprep.subr.bf16.mxu0 0
      %1278 = vmatpush1.bf16.msra.mxu0 0
      %1279 = vmatprep.subr.bf16.mxu0 0
      %1280 = vmatpush1.bf16.msra.mxu0 0
      %1281 = vmatprep.subr.bf16.mxu0 0
      %1282 = vmatpush1.bf16.msra.mxu0 0
      %1283 = vmatprep.subr.bf16.mxu0 0
      %1284 = vmatpush1.bf16.msra.mxu0 0
      %1285 = vmatprep.mubr.bf16.mxu0 0
      %1286 = vmatmul.mubr.bf16.gmra.mrb[0].mxu0 %v1227
      %v1287 = vpop.f32.mrb[0].mxu0
      %v1288 = vadd.f32 %v1164, %v1287
      %v1289 = vpop.f32.mrb[0].mxu0
      %v1290 = vpop.f32.mrb[0].mxu0
      %v1291 = vadd.f32 %v1167, %v1290
      %v1292 = vpop.f32.mrb[0].mxu0
      %1293 = vmatprep.mubr.bf16.mxu0 0
      %1294 = vmatmul.mubr.bf16.gmra.mrb[0].mxu0 %v1230
      %v1295 = vpop.f32.mrb[0].mxu0
      %v1296 = vadd.f32 %v1172, %v1295
      %v1297 = vpop.f32.mrb[0].mxu0
      %v1298 = vpop.f32.mrb[0].mxu0
      %v1299 = vadd.f32 %v1175, %v1298
      %v1300 = vpop.f32.mrb[0].mxu0
      %1301 = vmatprep.mubr.bf16.mxu0 0
      %1302 = vmatmul.mubr.bf16.gmra.mrb[0].mxu0 %v1233
      %v1303 = vpop.f32.mrb[0].mxu0
      %v1304 = vadd.f32 %v1180, %v1303
      %v1305 = vpop.f32.mrb[0].mxu0
      %v1306 = vpop.f32.mrb[0].mxu0
      %v1307 = vadd.f32 %v1183, %v1306
      %v1308 = vpop.f32.mrb[0].mxu0
      %1309 = vmatprep.mubr.bf16.mxu0 0
      %1310 = vmatmul.mubr.bf16.gmra.mrb[0].mxu0 %v1236
      %v1311 = vpop.f32.mrb[0].mxu0
      %v1312 = vadd.f32 %v1188, %v1311
      %v1313 = vpop.f32.mrb[0].mxu0
      %v1314 = vpop.f32.mrb[0].mxu0
      %v1315 = vadd.f32 %v1191, %v1314
      %v1316 = vpop.f32.mrb[0].mxu0
      %1317 = vmatprep.mubr.bf16.mxu0 0
      %1318 = vmatmul.mubr.bf16.gmra.mrb[0].mxu0 %v1239
      %v1319 = vpop.f32.mrb[0].mxu0
      %v1320 = vadd.f32 %v1196, %v1319
      %v1321 = vpop.f32.mrb[0].mxu0
      %v1322 = vpop.f32.mrb[0].mxu0
      %v1323 = vadd.f32 %v1199, %v1322
      %v1324 = vpop.f32.mrb[0].mxu0
      %1325 = vmatprep.mubr.bf16.mxu0 0
      %1326 = vmatmul.mubr.bf16.gmra.mrb[0].mxu0 %v1242
      %v1327 = vpop.f32.mrb[0].mxu0
      %v1328 = vadd.f32 %v1204, %v1327
      %v1329 = vpop.f32.mrb[0].mxu0
      %v1330 = vpop.f32.mrb[0].mxu0
      %v1331 = vadd.f32 %v1207, %v1330
      %v1332 = vpop.f32.mrb[0].mxu0
      %1333 = vmatprep.mubr.bf16.mxu0 0
      %1334 = vmatmul.mubr.bf16.gmra.mrb[0].mxu0 %v1245
      %v1335 = vpop.f32.mrb[0].mxu0
      %v1336 = vadd.f32 %v1212, %v1335
      %v1337 = vpop.f32.mrb[0].mxu0
      %v1338 = vpop.f32.mrb[0].mxu0
      %v1339 = vadd.f32 %v1215, %v1338
      %v1340 = vpop.f32.mrb[0].mxu0
      %1341 = vmatprep.mubr.bf16.mxu0 0
      %1342 = vmatmul.mubr.bf16.gmra.mrb[0].mxu0 %v1248
      %v1343 = vpop.f32.mrb[0].mxu0
      %v1344 = vadd.f32 %v1220, %v1343
      %v1345 = vpop.f32.mrb[0].mxu0
      %v1346 = vpop.f32.mrb[0].mxu0
      %v1347 = vadd.f32 %v1223, %v1346
      %v1348 = vpop.f32.mrb[0].mxu0
      %1349 = vdwg.mxu0
      %s1350 = scalar_lea.vmem [#allocation2], 48
      %v1351 = vld [vmem:[%s1350 + $0x1] sm:$0xff]
      %v1352 = vld [vmem:[%s1350 + $0x9] sm:$0xff]
      %v1353 = vld [vmem:[%s1350 + $0x19] sm:$0xff]
      %v1354 = vld [vmem:[%s1350 + $0x21] sm:$0xff]
      %v1355 = vld [vmem:[%s1350 + $0x31] sm:$0xff]
      %v1356 = vld [vmem:[%s1350 + $0x39] sm:$0xff]
      %v1357 = vld [vmem:[%s1350 + $0x49] sm:$0xff]
      %v1358 = vld [vmem:[%s1350 + $0x51] sm:$0xff]
      %v1359 = vld [vmem:[%s1350 + $0x61] sm:$0xff]
      %v1360 = vld [vmem:[%s1350 + $0x69] sm:$0xff]
      %v1361 = vld [vmem:[%s1350 + $0x79] sm:$0xff]
      %v1362 = vld [vmem:[%s1350 + $0x81] sm:$0xff]
      %v1363 = vld [vmem:[%s1350 + $0x91] sm:$0xff]
      %v1364 = vld [vmem:[%s1350 + $0x99] sm:$0xff]
      %v1365 = vld [vmem:[%s1350 + $0xa9] sm:$0xff]
      %v1366 = vld [vmem:[%s1350 + $0xb1] sm:$0xff]
      %v1367 = vpack.c.bf16 %v1352, %v1351
      %v1368 = vpack.c.bf16 %v1354, %v1353
      %v1369 = vpack.c.bf16 %v1356, %v1355
      %v1370 = vpack.c.bf16 %v1358, %v1357
      %v1371 = vpack.c.bf16 %v1360, %v1359
      %v1372 = vpack.c.bf16 %v1362, %v1361
      %v1373 = vpack.c.bf16 %v1364, %v1363
      %v1374 = vpack.c.bf16 %v1366, %v1365
      %s1375 = scalar_lea.vmem %s5, 8
      %v1376 = vld [vmem:[%s1375] sm:$0x7]
      %v1378 = vsel %vm1100, %v1367, 0
      %v1381 = vsel %vm1100, %v1368, 0
      %v1384 = vsel %vm1100, %v1369, 0
      %v1387 = vsel %vm1100, %v1370, 0
      %v1390 = vsel %vm1100, %v1371, 0
      %v1393 = vsel %vm1100, %v1372, 0
      %v1396 = vsel %vm1100, %v1373, 0
      %v1399 = vsel %vm1100, %v1374, 0
      %v1402 = vsel %vm1125, %v1376, 0
      %1404 = vmatprep.subr.bf16.mxu0 0
      %1405 = vmatpush1.bf16.msra.mxu0 %v1402
      %1406 = vmatprep.subr.bf16.mxu0 0
      %1407 = vmatpush1.bf16.msra.mxu0 0
      %1408 = vmatprep.subr.bf16.mxu0 0
      %1409 = vmatpush1.bf16.msra.mxu0 0
      %1410 = vmatprep.subr.bf16.mxu0 0
      %1411 = vmatpush1.bf16.msra.mxu0 0
      %1412 = vmatprep.subr.bf16.mxu0 0
      %1413 = vmatpush1.bf16.msra.mxu0 0
      %1414 = vmatprep.subr.bf16.mxu0 0
      %1415 = vmatpush1.bf16.msra.mxu0 0
      %1416 = vmatprep.subr.bf16.mxu0 0
      %1417 = vmatpush1.bf16.msra.mxu0 0
      %1418 = vmatprep.subr.bf16.mxu0 0
      %1419 = vmatpush1.bf16.msra.mxu0 0
      %1420 = vmatprep.subr.bf16.mxu0 0
      %1421 = vmatpush1.bf16.msra.mxu0 0
      %1422 = vmatprep.subr.bf16.mxu0 0
      %1423 = vmatpush1.bf16.msra.mxu0 0
      %1424 = vmatprep.subr.bf16.mxu0 0
      %1425 = vmatpush1.bf16.msra.mxu0 0
      %1426 = vmatprep.subr.bf16.mxu0 0
      %1427 = vmatpush1.bf16.msra.mxu0 0
      %1428 = vmatprep.subr.bf16.mxu0 0
      %1429 = vmatpush1.bf16.msra.mxu0 0
      %1430 = vmatprep.subr.bf16.mxu0 0
      %1431 = vmatpush1.bf16.msra.mxu0 0
      %1432 = vmatprep.subr.bf16.mxu0 0
      %1433 = vmatpush1.bf16.msra.mxu0 0
      %1434 = vmatprep.subr.bf16.mxu0 0
      %1435 = vmatpush1.bf16.msra.mxu0 0
      %1436 = vmatprep.mubr.bf16.mxu0 0
      %1437 = vmatmul.mubr.bf16.gmra.mrb[0].mxu0 %v1378
      %v1438 = vpop.f32.mrb[0].mxu0
      %v1439 = vadd.f32 0.0, %v1438
      %v1440 = vpop.f32.mrb[0].mxu0
      %v1441 = vpop.f32.mrb[0].mxu0
      %v1442 = vadd.f32 0.0, %v1441
      %v1443 = vpop.f32.mrb[0].mxu0
      %1444 = vmatprep.mubr.bf16.mxu0 0
      %1445 = vmatmul.mubr.bf16.gmra.mrb[0].mxu0 %v1381
      %v1446 = vpop.f32.mrb[0].mxu0
      %v1447 = vadd.f32 0.0, %v1446
      %v1448 = vpop.f32.mrb[0].mxu0
      %v1449 = vpop.f32.mrb[0].mxu0
      %v1450 = vadd.f32 0.0, %v1449
      %v1451 = vpop.f32.mrb[0].mxu0
      %1452 = vmatprep.mubr.bf16.mxu0 0
      %1453 = vmatmul.mubr.bf16.gmra.mrb[0].mxu0 %v1384
      %v1454 = vpop.f32.mrb[0].mxu0
      %v1455 = vadd.f32 0.0, %v1454
      %v1456 = vpop.f32.mrb[0].mxu0
      %v1457 = vpop.f32.mrb[0].mxu0
      %v1458 = vadd.f32 0.0, %v1457
      %v1459 = vpop.f32.mrb[0].mxu0
      %1460 = vmatprep.mubr.bf16.mxu0 0
      %1461 = vmatmul.mubr.bf16.gmra.mrb[0].mxu0 %v1387
      %v1462 = vpop.f32.mrb[0].mxu0
      %v1463 = vadd.f32 0.0, %v1462
      %v1464 = vpop.f32.mrb[0].mxu0
      %v1465 = vpop.f32.mrb[0].mxu0
      %v1466 = vadd.f32 0.0, %v1465
      %v1467 = vpop.f32.mrb[0].mxu0
      %1468 = vmatprep.mubr.bf16.mxu0 0
      %1469 = vmatmul.mubr.bf16.gmra.mrb[0].mxu0 %v1390
      %v1470 = vpop.f32.mrb[0].mxu0
      %v1471 = vadd.f32 0.0, %v1470
      %v1472 = vpop.f32.mrb[0].mxu0
      %v1473 = vpop.f32.mrb[0].mxu0
      %v1474 = vadd.f32 0.0, %v1473
      %v1475 = vpop.f32.mrb[0].mxu0
      %1476 = vmatprep.mubr.bf16.mxu0 0
      %1477 = vmatmul.mubr.bf16.gmra.mrb[0].mxu0 %v1393
      %v1478 = vpop.f32.mrb[0].mxu0
      %v1479 = vadd.f32 0.0, %v1478
      %v1480 = vpop.f32.mrb[0].mxu0
      %v1481 = vpop.f32.mrb[0].mxu0
      %v1482 = vadd.f32 0.0, %v1481
      %v1483 = vpop.f32.mrb[0].mxu0
      %1484 = vmatprep.mubr.bf16.mxu0 0
      %1485 = vmatmul.mubr.bf16.gmra.mrb[0].mxu0 %v1396
      %v1486 = vpop.f32.mrb[0].mxu0
      %v1487 = vadd.f32 0.0, %v1486
      %v1488 = vpop.f32.mrb[0].mxu0
      %v1489 = vpop.f32.mrb[0].mxu0
      %v1490 = vadd.f32 0.0, %v1489
      %v1491 = vpop.f32.mrb[0].mxu0
      %1492 = vmatprep.mubr.bf16.mxu0 0
      %1493 = vmatmul.mubr.bf16.gmra.mrb[0].mxu0 %v1399
      %v1494 = vpop.f32.mrb[0].mxu0
      %v1495 = vadd.f32 0.0, %v1494
      %v1496 = vpop.f32.mrb[0].mxu0
      %v1497 = vpop.f32.mrb[0].mxu0
      %v1498 = vadd.f32 0.0, %v1497
      %v1499 = vpop.f32.mrb[0].mxu0
      %1500 = vdwg.mxu0
      %v1501 = vadd.f32 %v1288, %v1439
      %v1502 = vadd.f32 %v1291, %v1442
      %v1503 = vadd.f32 %v1296, %v1447
      %v1504 = vadd.f32 %v1299, %v1450
      %v1505 = vadd.f32 %v1304, %v1455
      %v1506 = vadd.f32 %v1307, %v1458
      %v1507 = vadd.f32 %v1312, %v1463
      %v1508 = vadd.f32 %v1315, %v1466
      %v1509 = vadd.f32 %v1320, %v1471
      %v1510 = vadd.f32 %v1323, %v1474
      %v1511 = vadd.f32 %v1328, %v1479
      %v1512 = vadd.f32 %v1331, %v1482
      %v1513 = vadd.f32 %v1336, %v1487
      %v1514 = vadd.f32 %v1339, %v1490
      %v1515 = vadd.f32 %v1344, %v1495
      %v1516 = vadd.f32 %v1347, %v1498
      %v1517 = vld [vmem:[%s6] sm:$0x1]
      %v1519 = vlaneseq
      %v1520 = vshrl.u32 %v1519, 7
      %v1521 = vsub.s32 0, %v1520
      %v1522 = vrot.slane %v1517, %v1521
      %v1524 = vadd.f32 %v1501, %v1522
      %v1525 = vadd.f32 %v1502, %v1522
      %v1526 = vadd.f32 %v1503, %v1522
      %v1527 = vadd.f32 %v1504, %v1522
      %v1528 = vadd.f32 %v1505, %v1522
      %v1529 = vadd.f32 %v1506, %v1522
      %v1530 = vadd.f32 %v1507, %v1522
      %v1531 = vadd.f32 %v1508, %v1522
      %v1532 = vadd.f32 %v1509, %v1522
      %v1533 = vadd.f32 %v1510, %v1522
      %v1534 = vadd.f32 %v1511, %v1522
      %v1535 = vadd.f32 %v1512, %v1522
      %v1536 = vadd.f32 %v1513, %v1522
      %v1537 = vadd.f32 %v1514, %v1522
      %v1538 = vadd.f32 %v1515, %v1522
      %v1539 = vadd.f32 %v1516, %v1522
      %v1540 = vmul.f32 %v1524, 0.1
      %v1541 = vmul.f32 %v1525, 0.1
      %v1542 = vmul.f32 %v1526, 0.1
      %v1543 = vmul.f32 %v1527, 0.1
      %v1544 = vmul.f32 %v1528, 0.1
      %v1545 = vmul.f32 %v1529, 0.1
      %v1546 = vmul.f32 %v1530, 0.1
      %v1547 = vmul.f32 %v1531, 0.1
      %v1548 = vmul.f32 %v1532, 0.1
      %v1549 = vmul.f32 %v1533, 0.1
      %v1550 = vmul.f32 %v1534, 0.1
      %v1551 = vmul.f32 %v1535, 0.1
      %v1552 = vmul.f32 %v1536, 0.1
      %v1553 = vmul.f32 %v1537, 0.1
      %v1554 = vmul.f32 %v1538, 0.1
      %v1555 = vmul.f32 %v1539, 0.1
      %v1556 = vmax.f32 %v1524, %v1540
      %v1557 = vmax.f32 %v1525, %v1541
      %v1558 = vmax.f32 %v1526, %v1542
      %v1559 = vmax.f32 %v1527, %v1543
      %v1560 = vmax.f32 %v1528, %v1544
      %v1561 = vmax.f32 %v1529, %v1545
      %v1562 = vmax.f32 %v1530, %v1546
      %v1563 = vmax.f32 %v1531, %v1547
      %v1564 = vmax.f32 %v1532, %v1548
      %v1565 = vmax.f32 %v1533, %v1549
      %v1566 = vmax.f32 %v1534, %v1550
      %v1567 = vmax.f32 %v1535, %v1551
      %v1568 = vmax.f32 %v1536, %v1552
      %v1569 = vmax.f32 %v1537, %v1553
      %v1570 = vmax.f32 %v1538, %v1554
      %v1571 = vmax.f32 %v1539, %v1555
      %v1572 = vadd.f32 %v1556, %v448
      %v1573 = vadd.f32 %v1557, %v449
      %v1574 = vadd.f32 %v1558, %v450
      %v1575 = vadd.f32 %v1559, %v451
      %v1576 = vadd.f32 %v1560, %v452
      %v1577 = vadd.f32 %v1561, %v453
      %v1578 = vadd.f32 %v1562, %v454
      %v1579 = vadd.f32 %v1563, %v455
      %v1580 = vadd.f32 %v1564, %v456
      %v1581 = vadd.f32 %v1565, %v457
      %v1582 = vadd.f32 %v1566, %v458
      %v1583 = vadd.f32 %v1567, %v459
      %v1584 = vadd.f32 %v1568, %v460
      %v1585 = vadd.f32 %v1569, %v461
      %v1586 = vadd.f32 %v1570, %v462
      %v1587 = vadd.f32 %v1571, %v463
      %1588 = vst.msk [vmem:[%s445] sm:$0xff] %vm486, %v1572
      %1589 = vst.msk [vmem:[%s445 + $0x8] sm:$0xff] %vm486, %v1573
      %1590 = vst.msk [vmem:[%s445 + $0x10] sm:$0xff] %vm486, %v1574
      %1591 = vst.msk [vmem:[%s445 + $0x18] sm:$0xff] %vm486, %v1575
      %1592 = vst.msk [vmem:[%s445 + $0x20] sm:$0xff] %vm486, %v1576
      %1593 = vst.msk [vmem:[%s445 + $0x28] sm:$0xff] %vm486, %v1577
      %1594 = vst.msk [vmem:[%s445 + $0x30] sm:$0xff] %vm486, %v1578
      %1595 = vst.msk [vmem:[%s445 + $0x38] sm:$0xff] %vm486, %v1579
      %1596 = vst.msk [vmem:[%s445 + $0x40] sm:$0xff] %vm486, %v1580
      %1597 = vst.msk [vmem:[%s445 + $0x48] sm:$0xff] %vm486, %v1581
      %1598 = vst.msk [vmem:[%s445 + $0x50] sm:$0xff] %vm486, %v1582
      %1599 = vst.msk [vmem:[%s445 + $0x58] sm:$0xff] %vm486, %v1583
      %1600 = vst.msk [vmem:[%s445 + $0x60] sm:$0xff] %vm486, %v1584
      %1601 = vst.msk [vmem:[%s445 + $0x68] sm:$0xff] %vm486, %v1585
      %1602 = vst.msk [vmem:[%s445 + $0x70] sm:$0xff] %vm486, %v1586
      %1603 = vst.msk [vmem:[%s445 + $0x78] sm:$0xff] %vm486, %v1587
      %s1604 = smul.u32 8, %s23
      %p1605 = scmp.lt.s32.totalorder %s22, 1
      %s1606 = scalar_select %p1605, %s22, 1
      %p1607 = scmp.lt.s32.totalorder %s1604, 15
      %s1608 = scalar_select %p1607, %s1604, 15
      %s1609 = smul.addr %s1608, 2
      %s1610 = smul.addr %s1606, 32
      %s1611 = sadd.s32 %s1609, %s1610
      %s1612 = smul.addr %s1611, 8
      %s1613 = scalar_lea.vmem %s7, %s1612
      // Predicated region
      $region49: #{resblock_pallas.1} parent=47 // pred_check
        %p1614 = pneg %p234
      $region50: #{resblock_pallas.1} parent=47 // pred_check_branch
        %1616 = sbr.rel (%p1614) target = $region52
      $region51: #{resblock_pallas.1} parent=47 // pred_region
        %s1617 = smul.u32 8, %s23
      $region52: #{resblock_pallas.1} parent=47 // pred_fallthru
        _
    $region48: #{resblock_pallas.1} parent=5 // pred_fallthru
      _
    %p1618 = scmp.le.s32.totalorder 2, %s13
    // Predicated region
    $region53: #{resblock_pallas.1} parent=5 // pred_check
      %p1619 = pneg %p1618
    $region54: #{resblock_pallas.1} parent=5 // pred_check_branch
      %1621 = sbr.rel (%p1619) target = $region56
    $region55: #{resblock_pallas.1} parent=5 // pred_region
      %s1622 = ssub.s32 %s13, 2
      // Predicated region
      $region57: #{resblock_pallas.1} parent=55 // pred_check
        %p1623 = pneg %p240
      $region58: #{resblock_pallas.1} parent=55 // pred_check_branch
        %1625 = sbr.rel (%p1623) target = $region60
      $region59: #{resblock_pallas.1} parent=55 // pred_region
        %s1626 = smul.u32 8, %s25
        %p1627 = scmp.lt.s32.totalorder %s24, 1
        %s1628 = scalar_select %p1627, %s24, 1
        %p1629 = scmp.lt.s32.totalorder %s1626, 15
        %s1630 = scalar_select %p1629, %s1626, 15
        %s1631 = smul.addr %s1630, 2
        %s1632 = smul.addr %s1628, 32
        %s1633 = sadd.s32 %s1631, %s1632
        %s1634 = smul.addr %s1633, 8
        %s1635 = scalar_lea.vmem %s7, %s1634
      $region60: #{resblock_pallas.1} parent=55 // pred_fallthru
        _
    $region56: #{resblock_pallas.1} parent=5 // pred_fallthru
      _
  $region6: #{resblock_pallas.1} parent=0 // loop_footer
    %s17 = sadd.s32 1, %s13
  $region7: #{resblock_pallas.1} parent=0 // loop_footer_branch
    %12 = sbr.rel target = $region3
  $region8: #{resblock_pallas.1} parent=0 // loop_exit
    _

</llo_original>
